<compile_context>
chip_gen: v6e
topology: v6e:2x2x1
jax: 0.10.0
libtpu: 0.0.40
codegen_flags: <defaults>
</compile_context>

<pallas_src>
import functools

import jax
import jax.numpy as jnp
from jax import lax
from jax.experimental import pallas as pl
from jax.experimental.pallas import tpu as pltpu

EPS = 1e-5
LANE = 128
TILE_L_TARGET = 512                 # lane-tile target (multiple of 128)
VMEM_LIMIT = 32 * 1024 * 1024       # explicit scoped-VMEM budget (v7x-safe)


# ---------------------------------------------------------------------------
# in-kernel helpers
# ---------------------------------------------------------------------------
def _conv_taps(win, w, K, Cin, Cout, dil, TL):
    """VALID 1-D conv of `win` (N, Cin, TL+pad) with weights `w`
    (K*Cin, Cout, 1): K*Cin broadcasted VPU FMAs over (N, Cout, TL) vregs."""
    N = win.shape[0]
    acc = jnp.zeros((N, Cout, TL), jnp.float32)
    for k in range(K):                            # static unroll (K small)
        ofs = k * dil
        win_k = win[:, :, ofs:ofs + TL]           # (N, Cin, TL) lane-shifted
        for ci in range(Cin):
            w_kc = w[k * Cin + ci]                # (Cout, 1): Cout on sublanes
            acc = acc + w_kc[None, :, :] * win_k[:, ci:ci + 1, :]
    return acc


def _window(center_ref, halo_ref, pad):
    """(N, C, TL) centre tile extended by the first `pad` lanes of the next tile."""
    if pad == 0:
        return center_ref[...]
    return jnp.concatenate([center_ref[...], halo_ref[:, :, :pad]], axis=-1)


def _tile_stats(st_ref, h, t, TL, L):
    """Per-tile per-channel (sum, sum-of-squares); lanes beyond L are masked."""
    lane = lax.broadcasted_iota(jnp.int32, (1, 1, TL), 2)
    valid = ((t * TL + lane) < L).astype(h.dtype)
    hm = h * valid
    st_ref[0, :, 0:1] = jnp.sum(jnp.sum(hm, axis=0), axis=-1, keepdims=True)
    st_ref[0, :, 1:2] = jnp.sum(jnp.sum(hm * hm, axis=0), axis=-1, keepdims=True)


# ---------------------------------------------------------------------------
# kernels
# ---------------------------------------------------------------------------
def _conv1_kernel(xc_ref, xh_ref, w_ref, b_ref, h_ref, st_ref,
                  *, K, Cin, dil, TL, L):
    t = pl.program_id(0)
    pad = (K - 1) * dil
    win = _window(xc_ref, xh_ref, pad)                        # (N, Cin, TL+pad)
    h = _conv_taps(win, w_ref[...], K, Cin, Cin, dil, TL) + b_ref[...]
    h_ref[...] = h
    _tile_stats(st_ref, h, t, TL, L)


def _bn1_res_conv2_kernel(hc_ref, hh_ref, xc_ref, xh_ref, w_ref, b_ref,
                          sc_ref, sh_ref, h2_ref, st_ref,
                          *, K, Cin, Cout, dil, TL, L):
    t = pl.program_id(0)
    pad = (K - 1) * dil
    h1w = _window(hc_ref, hh_ref, pad)                        # (N, Cin, TL+pad)
    xw = _window(xc_ref, xh_ref, pad)
    # BN1 folded to a per-channel affine + ReLU + residual (pointwise, so it
    # commutes with the reflection padding done in the wrapper).
    c1w = jnp.maximum(h1w * sc_ref[...] + sh_ref[...], 0.0) + xw
    h2 = _conv_taps(c1w, w_ref[...], K, Cin, Cout, dil, TL) + b_ref[...]
    h2_ref[...] = h2
    _tile_stats(st_ref, h2, t, TL, L)


def _bn_relu_kernel(h_ref, sc_ref, sh_ref, o_ref):
    o_ref[...] = jnp.maximum(h_ref[...] * sc_ref[...] + sh_ref[...], 0.0)


# ---------------------------------------------------------------------------
# wrapper
# ---------------------------------------------------------------------------
def _fold_bn(partial_stats, gamma, beta, count):
    """(num_tiles, C, 2) partial sums -> folded per-channel (scale, shift)."""
    sums = jnp.sum(partial_stats, axis=0)                     # (C, 2)
    mean = sums[:, 0] / count
    var = sums[:, 1] / count - mean * mean                    # biased variance
    scale = gamma.reshape(-1) * lax.rsqrt(var + EPS)
    shift = beta.reshape(-1) - mean * scale
    C = scale.shape[0]
    return scale.reshape(1, C, 1), shift.reshape(1, C, 1)


def res_convblock(x, params, *, kernel_size, stride=1, dilation=1):
    """x: (N, Cin, L) float32, PyTorch NCL layout.  Returns (N, Cout, L)."""
    w1, b1, g1, be1, w2, b2, g2, be2 = params
    if stride != 1:
        # TODO(synk): stride > 1 for conv2 is not implemented in the tiled
        # Pallas path; the module default (stride=1) is what is supported.
        raise NotImplementedError("res_convblock Pallas path supports stride=1")

    N, Cin, L = x.shape
    K = kernel_size
    Cout = w2.shape[2]
    pad = (K - 1) * dilation
    l_pad, r_pad = pad // 2, pad - pad // 2
    assert max(l_pad, r_pad) <= L - 1, "reflection pad must be smaller than L"
    assert pad <= LANE, "conv halo wider than one 128-lane block is unsupported"

    TL = min(TILE_L_TARGET, LANE * pl.cdiv(L, LANE))   # lane tile (multiple of 128)
    nt = pl.cdiv(L, TL)                                # number of L tiles
    Ltot = (nt + 1) * TL                               # padded length (halo-safe)
    Lbuf = nt * TL                                     # tiled output length
    f32 = jnp.float32
    x = x.astype(f32)

    def pad_L(a):  # reflection pad (SAME conv), then zero-pad to Ltot
        a = jnp.pad(a, ((0, 0), (0, 0), (l_pad, r_pad)), mode="reflect")
        return jnp.pad(a, ((0, 0), (0, 0), (0, Ltot - a.shape[-1])))

    # parameters rearranged once for lane-friendly in-kernel access
    w1r = w1.astype(f32).reshape(K * Cin, Cin, 1)      # row k*Cin+ci -> W1[k, ci, :]
    w2r = w2.astype(f32).reshape(K * Cin, Cout, 1)
    b1r = b1.astype(f32).reshape(1, Cin, 1)
    b2r = b2.astype(f32).reshape(1, Cout, 1)

    xp = pad_L(x)                                      # (N, Cin, Ltot)

    tile = lambda C: pl.BlockSpec((N, C, TL), lambda t: (0, 0, t))
    halo = lambda C: pl.BlockSpec((N, C, LANE),
                                  lambda t: (0, 0, (t + 1) * (TL // LANE)))
    resident = lambda shape: pl.BlockSpec(shape, lambda t: (0,) * len(shape))
    stats_spec = lambda C: pl.BlockSpec((1, C, 2), lambda t: (t, 0, 0))
    cparams = pltpu.CompilerParams(dimension_semantics=("parallel",),
                                   vmem_limit_bytes=VMEM_LIMIT)

    # ---- pass A: conv1 + per-tile batch-stat partials ---------------------
    h1, st1 = pl.pallas_call(
        functools.partial(_conv1_kernel, K=K, Cin=Cin, dil=dilation, TL=TL, L=L),
        grid=(nt,),
        in_specs=[tile(Cin), halo(Cin),
                  resident((K * Cin, Cin, 1)), resident((1, Cin, 1))],
        out_specs=(tile(Cin), stats_spec(Cin)),
        out_shape=(jax.ShapeDtypeStruct((N, Cin, Lbuf), f32),
                   jax.ShapeDtypeStruct((nt, Cin, 2), f32)),
        compiler_params=cparams,
    )(xp, xp, w1r, b1r)

    sc1, sh1 = _fold_bn(st1, g1, be1, jnp.float32(N * L))

    # ---- pass B: BN1 affine + ReLU + residual, conv2, stat partials -------
    h1p = pad_L(h1[:, :, :L])
    h2, st2 = pl.pallas_call(
        functools.partial(_bn1_res_conv2_kernel, K=K, Cin=Cin, Cout=Cout,
                          dil=dilation, TL=TL, L=L),
        grid=(nt,),
        in_specs=[tile(Cin), halo(Cin), tile(Cin), halo(Cin),
                  resident((K * Cin, Cout, 1)), resident((1, Cout, 1)),
                  resident((1, Cin, 1)), resident((1, Cin, 1))],
        out_specs=(tile(Cout), stats_spec(Cout)),
        out_shape=(jax.ShapeDtypeStruct((N, Cout, Lbuf), f32),
                   jax.ShapeDtypeStruct((nt, Cout, 2), f32)),
        compiler_params=cparams,
    )(h1p, h1p, xp, xp, w2r, b2r, sc1, sh1)

    sc2, sh2 = _fold_bn(st2, g2, be2, jnp.float32(N * L))

    # ---- pass C: BN2 affine + ReLU (pointwise, fully parallel) ------------
    y = pl.pallas_call(
        _bn_relu_kernel,
        grid=(nt,),
        in_specs=[tile(Cout), resident((1, Cout, 1)), resident((1, Cout, 1))],
        out_specs=tile(Cout),
        out_shape=jax.ShapeDtypeStruct((N, Cout, Lbuf), f32),
        compiler_params=cparams,
    )(h2, sc2, sh2)

    return y[:, :, :L]


# ---------------------------------------------------------------------------
# independent pure-JAX reference
# ---------------------------------------------------------------------------
def _reference(x, params, *, kernel_size, stride=1, dilation=1):
    w1, b1, g1, be1, w2, b2, g2, be2 = params

    def layer(xx, w, b, g, be, s):
        w_oik = jnp.transpose(w, (2, 1, 0))            # (K,Cin,Cout) -> (Cout,Cin,K)
        pad = (kernel_size - 1) * dilation
        l_pad, r_pad = pad // 2, pad - pad // 2
        xxp = jnp.pad(xx, ((0, 0), (0, 0), (l_pad, r_pad)), mode="reflect")
        h = lax.conv_general_dilated(
            xxp, w_oik, window_strides=(s,), padding="VALID",
            rhs_dilation=(dilation,), dimension_numbers=("NCH", "OIH", "NCH"))
        h = h + b.reshape(1, -1, 1)
        mean = jnp.mean(h, axis=(0, 2), keepdims=True)
        var = jnp.mean((h - mean) ** 2, axis=(0, 2), keepdims=True)
        yy = (g.reshape(1, -1, 1) * (h - mean) / jnp.sqrt(var + EPS)
              + be.reshape(1, -1, 1))
        return jnp.maximum(yy, 0.0)

    c1 = layer(x, w1, b1, g1, be1, 1) + x
    return layer(c1, w2, b2, g2, be2, stride)


if __name__ == "__main__":
    N, Cin, Cout, L, K = 2, 4, 8, 16, 3
    stride, dilation = 1, 1

    key = jax.random.PRNGKey(0)
    ks = jax.random.split(key, 10)
    # Kernel weights stored as (K, Cin, Cout): w[k, ci, co] == W_pytorch[co, ci, k].
    w1 = 0.2 * jax.random.normal(ks[0], (K, Cin, Cin), jnp.float32)
    b1 = 0.1 * jax.random.normal(ks[1], (1, Cin), jnp.float32)
    g1 = 1.0 + 0.1 * jax.random.normal(ks[2], (1, Cin), jnp.float32)
    be1 = 0.1 * jax.random.normal(ks[3], (1, Cin), jnp.float32)
    w2 = 0.2 * jax.random.normal(ks[4], (K, Cin, Cout), jnp.float32)
    b2 = 0.1 * jax.random.normal(ks[5], (1, Cout), jnp.float32)
    g2 = 1.0 + 0.1 * jax.random.normal(ks[6], (1, Cout), jnp.float32)
    be2 = 0.1 * jax.random.normal(ks[7], (1, Cout), jnp.float32)
    params = (w1, b1, g1, be1, w2, b2, g2, be2)

    x = jax.random.normal(ks[8], (N, Cin, L), jnp.float32)   # PyTorch NCL input

    fn = jax.jit(functools.partial(res_convblock, kernel_size=K,
                                   stride=stride, dilation=dilation))
    out = jax.block_until_ready(fn(x, params))

    ref = jax.block_until_ready(
        _reference(x, params, kernel_size=K, stride=stride, dilation=dilation))

    assert out.shape == (N, Cout, L), out.shape
    assert jnp.allclose(out, ref, rtol=2e-4, atol=2e-4), (
        float(jnp.max(jnp.abs(out - ref))))
    print("KERNEL_OK")
</pallas_src>

<mosaic_0001>
module attributes {stable_mosaic.version = 11 : i64} {
  func.func @_bn1_res_conv2_kernel(%arg0: i32, %arg1: memref<2x4x128xf32, #tpu.memory_space<vmem>>, %arg2: memref<2x4x128xf32, #tpu.memory_space<vmem>>, %arg3: memref<2x4x128xf32, #tpu.memory_space<vmem>>, %arg4: memref<2x4x128xf32, #tpu.memory_space<vmem>>, %arg5: memref<12x8x1xf32, #tpu.memory_space<vmem>>, %arg6: memref<1x8x1xf32, #tpu.memory_space<vmem>>, %arg7: memref<1x4x1xf32, #tpu.memory_space<vmem>>, %arg8: memref<1x4x1xf32, #tpu.memory_space<vmem>>, %arg9: memref<2x8x128xf32, #tpu.memory_space<vmem>>, %arg10: memref<1x8x2xf32, #tpu.memory_space<vmem>>) attributes {dimension_semantics = [#tpu.dimension_semantics<parallel>], iteration_bounds = array<i64: 1>, scalar_prefetch = 0 : i64, scratch_operands = 0 : i64, tpu.core_type = #tpu.core_type<tc>, window_params = [{transform_indices = @transform_0, window_bounds = array<i64: 2, 4, 128>}, {transform_indices = @transform_1, window_bounds = array<i64: 2, 4, 128>}, {transform_indices = @transform_2, window_bounds = array<i64: 2, 4, 128>}, {transform_indices = @transform_3, window_bounds = array<i64: 2, 4, 128>}, {pipeline_mode = #tpu.pipeline_mode<synchronous>, transform_indices = @transform_4, window_bounds = array<i64: 12, 8, 1>}, {pipeline_mode = #tpu.pipeline_mode<synchronous>, transform_indices = @transform_5, window_bounds = array<i64: 1, 8, 1>}, {pipeline_mode = #tpu.pipeline_mode<synchronous>, transform_indices = @transform_6, window_bounds = array<i64: 1, 4, 1>}, {pipeline_mode = #tpu.pipeline_mode<synchronous>, transform_indices = @transform_7, window_bounds = array<i64: 1, 4, 1>}, {transform_indices = @transform_8, window_bounds = array<i64: 2, 8, 128>}, {transform_indices = @transform_9, window_bounds = array<i64: 1, 8, 2>}]} {
    %c0 = arith.constant 0 : index
    %c0_0 = arith.constant 0 : index
    %c0_1 = arith.constant 0 : index
    %0 = vector.load %arg1[%c0, %c0_0, %c0_1] : memref<2x4x128xf32, #tpu.memory_space<vmem>>, vector<2x4x128xf32>
    %c0_2 = arith.constant 0 : index
    %c0_3 = arith.constant 0 : index
    %c0_4 = arith.constant 0 : index
    %1 = vector.load %arg2[%c0_2, %c0_3, %c0_4] : memref<2x4x128xf32, #tpu.memory_space<vmem>>, vector<2x4x2xf32>
    %2 = tpu.concatenate %0, %1 in 2 : vector<2x4x128xf32>, vector<2x4x2xf32> -> vector<2x4x130xf32>
    %c0_5 = arith.constant 0 : index
    %c0_6 = arith.constant 0 : index
    %c0_7 = arith.constant 0 : index
    %3 = vector.load %arg3[%c0_5, %c0_6, %c0_7] : memref<2x4x128xf32, #tpu.memory_space<vmem>>, vector<2x4x128xf32>
    %c0_8 = arith.constant 0 : index
    %c0_9 = arith.constant 0 : index
    %c0_10 = arith.constant 0 : index
    %4 = vector.load %arg4[%c0_8, %c0_9, %c0_10] : memref<2x4x128xf32, #tpu.memory_space<vmem>>, vector<2x4x2xf32>
    %5 = tpu.concatenate %3, %4 in 2 : vector<2x4x128xf32>, vector<2x4x2xf32> -> vector<2x4x130xf32>
    %c0_11 = arith.constant 0 : index
    %c0_12 = arith.constant 0 : index
    %c0_13 = arith.constant 0 : index
    %6 = vector.load %arg7[%c0_11, %c0_12, %c0_13] : memref<1x4x1xf32, #tpu.memory_space<vmem>>, vector<1x4x1xf32>
    %7 = vector.broadcast %6 : vector<1x4x1xf32> to vector<2x4x130xf32>
    %8 = arith.mulf %2, %7 : vector<2x4x130xf32>
    %c0_14 = arith.constant 0 : index
    %c0_15 = arith.constant 0 : index
    %c0_16 = arith.constant 0 : index
    %9 = vector.load %arg8[%c0_14, %c0_15, %c0_16] : memref<1x4x1xf32, #tpu.memory_space<vmem>>, vector<1x4x1xf32>
    %10 = vector.broadcast %9 : vector<1x4x1xf32> to vector<2x4x130xf32>
    %11 = arith.addf %8, %10 : vector<2x4x130xf32>
    %cst = arith.constant 0.000000e+00 : f32
    %12 = vector.broadcast %cst : f32 to vector<2x4x130xf32>
    %13 = arith.maximumf %11, %12 : vector<2x4x130xf32>
    %14 = arith.addf %13, %5 : vector<2x4x130xf32>
    %c0_17 = arith.constant 0 : index
    %c0_18 = arith.constant 0 : index
    %c0_19 = arith.constant 0 : index
    %15 = vector.load %arg5[%c0_17, %c0_18, %c0_19] : memref<12x8x1xf32, #tpu.memory_space<vmem>>, vector<12x8x1xf32>
    %cst_20 = arith.constant 0.000000e+00 : f32
    %16 = vector.broadcast %cst_20 : f32 to vector<2x8x128xf32>
    %17 = vector.extract_strided_slice %14 {offsets = [0, 0, 0], sizes = [2, 4, 128], strides = [1, 1, 1]} : vector<2x4x130xf32> to vector<2x4x128xf32>
    %18 = vector.extract_strided_slice %15 {offsets = [0, 0, 0], sizes = [1, 8, 1], strides = [1, 1, 1]} : vector<12x8x1xf32> to vector<1x8x1xf32>
    %19 = vector.shape_cast %18 : vector<1x8x1xf32> to vector<8x1xf32>
    %20 = vector.shape_cast %19 : vector<8x1xf32> to vector<1x8x1xf32>
    %21 = vector.extract_strided_slice %17 {offsets = [0, 0, 0], sizes = [2, 1, 128], strides = [1, 1, 1]} : vector<2x4x128xf32> to vector<2x1x128xf32>
    %22 = vector.broadcast %20 : vector<1x8x1xf32> to vector<2x8x128xf32>
    %23 = vector.broadcast %21 : vector<2x1x128xf32> to vector<2x8x128xf32>
    %24 = arith.mulf %22, %23 : vector<2x8x128xf32>
    %25 = arith.addf %16, %24 : vector<2x8x128xf32>
    %26 = vector.extract_strided_slice %15 {offsets = [1, 0, 0], sizes = [1, 8, 1], strides = [1, 1, 1]} : vector<12x8x1xf32> to vector<1x8x1xf32>
    %27 = vector.shape_cast %26 : vector<1x8x1xf32> to vector<8x1xf32>
    %28 = vector.shape_cast %27 : vector<8x1xf32> to vector<1x8x1xf32>
    %29 = vector.extract_strided_slice %17 {offsets = [0, 1, 0], sizes = [2, 1, 128], strides = [1, 1, 1]} : vector<2x4x128xf32> to vector<2x1x128xf32>
    %30 = vector.broadcast %28 : vector<1x8x1xf32> to vector<2x8x128xf32>
    %31 = vector.broadcast %29 : vector<2x1x128xf32> to vector<2x8x128xf32>
    %32 = arith.mulf %30, %31 : vector<2x8x128xf32>
    %33 = arith.addf %25, %32 : vector<2x8x128xf32>
    %34 = vector.extract_strided_slice %15 {offsets = [2, 0, 0], sizes = [1, 8, 1], strides = [1, 1, 1]} : vector<12x8x1xf32> to vector<1x8x1xf32>
    %35 = vector.shape_cast %34 : vector<1x8x1xf32> to vector<8x1xf32>
    %36 = vector.shape_cast %35 : vector<8x1xf32> to vector<1x8x1xf32>
    %37 = vector.extract_strided_slice %17 {offsets = [0, 2, 0], sizes = [2, 1, 128], strides = [1, 1, 1]} : vector<2x4x128xf32> to vector<2x1x128xf32>
    %38 = vector.broadcast %36 : vector<1x8x1xf32> to vector<2x8x128xf32>
    %39 = vector.broadcast %37 : vector<2x1x128xf32> to vector<2x8x128xf32>
    %40 = arith.mulf %38, %39 : vector<2x8x128xf32>
    %41 = arith.addf %33, %40 : vector<2x8x128xf32>
    %42 = vector.extract_strided_slice %15 {offsets = [3, 0, 0], sizes = [1, 8, 1], strides = [1, 1, 1]} : vector<12x8x1xf32> to vector<1x8x1xf32>
    %43 = vector.shape_cast %42 : vector<1x8x1xf32> to vector<8x1xf32>
    %44 = vector.shape_cast %43 : vector<8x1xf32> to vector<1x8x1xf32>
    %45 = vector.extract_strided_slice %17 {offsets = [0, 3, 0], sizes = [2, 1, 128], strides = [1, 1, 1]} : vector<2x4x128xf32> to vector<2x1x128xf32>
    %46 = vector.broadcast %44 : vector<1x8x1xf32> to vector<2x8x128xf32>
    %47 = vector.broadcast %45 : vector<2x1x128xf32> to vector<2x8x128xf32>
    %48 = arith.mulf %46, %47 : vector<2x8x128xf32>
    %49 = arith.addf %41, %48 : vector<2x8x128xf32>
    %50 = vector.extract_strided_slice %14 {offsets = [0, 0, 1], sizes = [2, 4, 128], strides = [1, 1, 1]} : vector<2x4x130xf32> to vector<2x4x128xf32>
    %51 = vector.extract_strided_slice %15 {offsets = [4, 0, 0], sizes = [1, 8, 1], strides = [1, 1, 1]} : vector<12x8x1xf32> to vector<1x8x1xf32>
    %52 = vector.shape_cast %51 : vector<1x8x1xf32> to vector<8x1xf32>
    %53 = vector.shape_cast %52 : vector<8x1xf32> to vector<1x8x1xf32>
    %54 = vector.extract_strided_slice %50 {offsets = [0, 0, 0], sizes = [2, 1, 128], strides = [1, 1, 1]} : vector<2x4x128xf32> to vector<2x1x128xf32>
    %55 = vector.broadcast %53 : vector<1x8x1xf32> to vector<2x8x128xf32>
    %56 = vector.broadcast %54 : vector<2x1x128xf32> to vector<2x8x128xf32>
    %57 = arith.mulf %55, %56 : vector<2x8x128xf32>
    %58 = arith.addf %49, %57 : vector<2x8x128xf32>
    %59 = vector.extract_strided_slice %15 {offsets = [5, 0, 0], sizes = [1, 8, 1], strides = [1, 1, 1]} : vector<12x8x1xf32> to vector<1x8x1xf32>
    %60 = vector.shape_cast %59 : vector<1x8x1xf32> to vector<8x1xf32>
    %61 = vector.shape_cast %60 : vector<8x1xf32> to vector<1x8x1xf32>
    %62 = vector.extract_strided_slice %50 {offsets = [0, 1, 0], sizes = [2, 1, 128], strides = [1, 1, 1]} : vector<2x4x128xf32> to vector<2x1x128xf32>
    %63 = vector.broadcast %61 : vector<1x8x1xf32> to vector<2x8x128xf32>
    %64 = vector.broadcast %62 : vector<2x1x128xf32> to vector<2x8x128xf32>
    %65 = arith.mulf %63, %64 : vector<2x8x128xf32>
    %66 = arith.addf %58, %65 : vector<2x8x128xf32>
    %67 = vector.extract_strided_slice %15 {offsets = [6, 0, 0], sizes = [1, 8, 1], strides = [1, 1, 1]} : vector<12x8x1xf32> to vector<1x8x1xf32>
    %68 = vector.shape_cast %67 : vector<1x8x1xf32> to vector<8x1xf32>
    %69 = vector.shape_cast %68 : vector<8x1xf32> to vector<1x8x1xf32>
    %70 = vector.extract_strided_slice %50 {offsets = [0, 2, 0], sizes = [2, 1, 128], strides = [1, 1, 1]} : vector<2x4x128xf32> to vector<2x1x128xf32>
    %71 = vector.broadcast %69 : vector<1x8x1xf32> to vector<2x8x128xf32>
    %72 = vector.broadcast %70 : vector<2x1x128xf32> to vector<2x8x128xf32>
    %73 = arith.mulf %71, %72 : vector<2x8x128xf32>
    %74 = arith.addf %66, %73 : vector<2x8x128xf32>
    %75 = vector.extract_strided_slice %15 {offsets = [7, 0, 0], sizes = [1, 8, 1], strides = [1, 1, 1]} : vector<12x8x1xf32> to vector<1x8x1xf32>
    %76 = vector.shape_cast %75 : vector<1x8x1xf32> to vector<8x1xf32>
    %77 = vector.shape_cast %76 : vector<8x1xf32> to vector<1x8x1xf32>
    %78 = vector.extract_strided_slice %50 {offsets = [0, 3, 0], sizes = [2, 1, 128], strides = [1, 1, 1]} : vector<2x4x128xf32> to vector<2x1x128xf32>
    %79 = vector.broadcast %77 : vector<1x8x1xf32> to vector<2x8x128xf32>
    %80 = vector.broadcast %78 : vector<2x1x128xf32> to vector<2x8x128xf32>
    %81 = arith.mulf %79, %80 : vector<2x8x128xf32>
    %82 = arith.addf %74, %81 : vector<2x8x128xf32>
    %83 = vector.extract_strided_slice %14 {offsets = [0, 0, 2], sizes = [2, 4, 128], strides = [1, 1, 1]} : vector<2x4x130xf32> to vector<2x4x128xf32>
    %84 = vector.extract_strided_slice %15 {offsets = [8, 0, 0], sizes = [1, 8, 1], strides = [1, 1, 1]} : vector<12x8x1xf32> to vector<1x8x1xf32>
    %85 = vector.shape_cast %84 : vector<1x8x1xf32> to vector<8x1xf32>
    %86 = vector.shape_cast %85 : vector<8x1xf32> to vector<1x8x1xf32>
    %87 = vector.extract_strided_slice %83 {offsets = [0, 0, 0], sizes = [2, 1, 128], strides = [1, 1, 1]} : vector<2x4x128xf32> to vector<2x1x128xf32>
    %88 = vector.broadcast %86 : vector<1x8x1xf32> to vector<2x8x128xf32>
    %89 = vector.broadcast %87 : vector<2x1x128xf32> to vector<2x8x128xf32>
    %90 = arith.mulf %88, %89 : vector<2x8x128xf32>
    %91 = arith.addf %82, %90 : vector<2x8x128xf32>
    %92 = vector.extract_strided_slice %15 {offsets = [9, 0, 0], sizes = [1, 8, 1], strides = [1, 1, 1]} : vector<12x8x1xf32> to vector<1x8x1xf32>
    %93 = vector.shape_cast %92 : vector<1x8x1xf32> to vector<8x1xf32>
    %94 = vector.shape_cast %93 : vector<8x1xf32> to vector<1x8x1xf32>
    %95 = vector.extract_strided_slice %83 {offsets = [0, 1, 0], sizes = [2, 1, 128], strides = [1, 1, 1]} : vector<2x4x128xf32> to vector<2x1x128xf32>
    %96 = vector.broadcast %94 : vector<1x8x1xf32> to vector<2x8x128xf32>
    %97 = vector.broadcast %95 : vector<2x1x128xf32> to vector<2x8x128xf32>
    %98 = arith.mulf %96, %97 : vector<2x8x128xf32>
    %99 = arith.addf %91, %98 : vector<2x8x128xf32>
    %100 = vector.extract_strided_slice %15 {offsets = [10, 0, 0], sizes = [1, 8, 1], strides = [1, 1, 1]} : vector<12x8x1xf32> to vector<1x8x1xf32>
    %101 = vector.shape_cast %100 : vector<1x8x1xf32> to vector<8x1xf32>
    %102 = vector.shape_cast %101 : vector<8x1xf32> to vector<1x8x1xf32>
    %103 = vector.extract_strided_slice %83 {offsets = [0, 2, 0], sizes = [2, 1, 128], strides = [1, 1, 1]} : vector<2x4x128xf32> to vector<2x1x128xf32>
    %104 = vector.broadcast %102 : vector<1x8x1xf32> to vector<2x8x128xf32>
    %105 = vector.broadcast %103 : vector<2x1x128xf32> to vector<2x8x128xf32>
    %106 = arith.mulf %104, %105 : vector<2x8x128xf32>
    %107 = arith.addf %99, %106 : vector<2x8x128xf32>
    %108 = vector.extract_strided_slice %15 {offsets = [11, 0, 0], sizes = [1, 8, 1], strides = [1, 1, 1]} : vector<12x8x1xf32> to vector<1x8x1xf32>
    %109 = vector.shape_cast %108 : vector<1x8x1xf32> to vector<8x1xf32>
    %110 = vector.shape_cast %109 : vector<8x1xf32> to vector<1x8x1xf32>
    %111 = vector.extract_strided_slice %83 {offsets = [0, 3, 0], sizes = [2, 1, 128], strides = [1, 1, 1]} : vector<2x4x128xf32> to vector<2x1x128xf32>
    %112 = vector.broadcast %110 : vector<1x8x1xf32> to vector<2x8x128xf32>
    %113 = vector.broadcast %111 : vector<2x1x128xf32> to vector<2x8x128xf32>
    %114 = arith.mulf %112, %113 : vector<2x8x128xf32>
    %115 = arith.addf %107, %114 : vector<2x8x128xf32>
    %c0_21 = arith.constant 0 : index
    %c0_22 = arith.constant 0 : index
    %c0_23 = arith.constant 0 : index
    %116 = vector.load %arg6[%c0_21, %c0_22, %c0_23] : memref<1x8x1xf32, #tpu.memory_space<vmem>>, vector<1x8x1xf32>
    %117 = vector.broadcast %116 : vector<1x8x1xf32> to vector<2x8x128xf32>
    %118 = arith.addf %115, %117 : vector<2x8x128xf32>
    %c0_24 = arith.constant 0 : index
    %c0_25 = arith.constant 0 : index
    %c0_26 = arith.constant 0 : index
    %119 = vector.load %arg9[%c0_24, %c0_25, %c0_26] : memref<2x8x128xf32, #tpu.memory_space<vmem>>, vector<2x8x128xf32>
    tpu.vector_store %arg9[%c0_24, %c0_25, %c0_26], %118 {strides = array<i32>} : memref<2x8x128xf32, #tpu.memory_space<vmem>>, vector<2x8x128xf32>,
    %120 = tpu.iota {dimensions = array<i32: 2>} : vector<1x1x128xi32>
    %c128_i32 = arith.constant 128 : i32
    %121 = arith.muli %arg0, %c128_i32 : i32
    %122 = vector.broadcast %121 : i32 to vector<1x1x128xi32>
    %123 = arith.addi %122, %120 : vector<1x1x128xi32>
    %c16_i32 = arith.constant 16 : i32
    %124 = vector.broadcast %c16_i32 : i32 to vector<1x1x128xi32>
    %125 = arith.cmpi slt, %123, %124 : vector<1x1x128xi32>
    %126 = arith.extui %125 : vector<1x1x128xi1> to vector<1x1x128xi32>
    %127 = arith.sitofp %126 : vector<1x1x128xi32> to vector<1x1x128xf32>
    %128 = vector.broadcast %127 : vector<1x1x128xf32> to vector<2x8x128xf32>
    %129 = arith.mulf %118, %128 : vector<2x8x128xf32>
    %cst_27 = arith.constant dense<0.000000e+00> : vector<8x128xf32>
    %130 = vector.multi_reduction <add>, %129, %cst_27 [0] : vector<2x8x128xf32> to vector<8x128xf32>
    %cst_28 = arith.constant dense<0.000000e+00> : vector<8xf32>
    %131 = vector.multi_reduction <add>, %130, %cst_28 [1] : vector<8x128xf32> to vector<8xf32>
    %132 = vector.shape_cast %131 : vector<8xf32> to vector<8x1xf32>
    %c0_29 = arith.constant 0 : index
    %c0_30 = arith.constant 0 : index
    %c0_31 = arith.constant 0 : index
    %133 = vector.load %arg10[%c0_29, %c0_30, %c0_31] : memref<1x8x2xf32, #tpu.memory_space<vmem>>, vector<1x8x1xf32>
    %134 = vector.shape_cast %133 : vector<1x8x1xf32> to vector<8x1xf32>
    %135 = vector.shape_cast %132 : vector<8x1xf32> to vector<1x8x1xf32>
    tpu.vector_store %arg10[%c0_29, %c0_30, %c0_31], %135 {strides = array<i32>} : memref<1x8x2xf32, #tpu.memory_space<vmem>>, vector<1x8x1xf32>,
    %136 = arith.mulf %129, %129 : vector<2x8x128xf32>
    %cst_32 = arith.constant dense<0.000000e+00> : vector<8x128xf32>
    %137 = vector.multi_reduction <add>, %136, %cst_32 [0] : vector<2x8x128xf32> to vector<8x128xf32>
    %cst_33 = arith.constant dense<0.000000e+00> : vector<8xf32>
    %138 = vector.multi_reduction <add>, %137, %cst_33 [1] : vector<8x128xf32> to vector<8xf32>
    %139 = vector.shape_cast %138 : vector<8xf32> to vector<8x1xf32>
    %c0_34 = arith.constant 0 : index
    %c0_35 = arith.constant 0 : index
    %c1 = arith.constant 1 : index
    %140 = vector.load %arg10[%c0_34, %c0_35, %c1] : memref<1x8x2xf32, #tpu.memory_space<vmem>>, vector<1x8x1xf32>
    %141 = vector.shape_cast %140 : vector<1x8x1xf32> to vector<8x1xf32>
    %142 = vector.shape_cast %139 : vector<8x1xf32> to vector<1x8x1xf32>
    tpu.vector_store %arg10[%c0_34, %c0_35, %c1], %142 {strides = array<i32>} : memref<1x8x2xf32, #tpu.memory_space<vmem>>, vector<1x8x1xf32>,
    return
  }
  func.func @transform_0(%arg0: i32) -> (i32, i32, i32) {
    %c0_i32 = arith.constant 0 : i32
    %c0_i32_0 = arith.constant 0 : i32
    %c0_i32_1 = arith.constant 0 : i32
    return %c0_i32, %c0_i32_0, %arg0 : i32, i32, i32
  }
  func.func @transform_1(%arg0: i32) -> (i32, i32, i32) {
    %c1_i32 = arith.constant 1 : i32
    %0 = arith.addi %arg0, %c1_i32 : i32
    %c1_i32_0 = arith.constant 1 : i32
    %1 = arith.muli %0, %c1_i32_0 : i32
    %c0_i32 = arith.constant 0 : i32
    %c0_i32_1 = arith.constant 0 : i32
    %c0_i32_2 = arith.constant 0 : i32
    return %c0_i32, %c0_i32_1, %1 : i32, i32, i32
  }
  func.func @transform_2(%arg0: i32) -> (i32, i32, i32) {
    %c0_i32 = arith.constant 0 : i32
    %c0_i32_0 = arith.constant 0 : i32
    %c0_i32_1 = arith.constant 0 : i32
    return %c0_i32, %c0_i32_0, %arg0 : i32, i32, i32
  }
  func.func @transform_3(%arg0: i32) -> (i32, i32, i32) {
    %c1_i32 = arith.constant 1 : i32
    %0 = arith.addi %arg0, %c1_i32 : i32
    %c1_i32_0 = arith.constant 1 : i32
    %1 = arith.muli %0, %c1_i32_0 : i32
    %c0_i32 = arith.constant 0 : i32
    %c0_i32_1 = arith.constant 0 : i32
    %c0_i32_2 = arith.constant 0 : i32
    return %c0_i32, %c0_i32_1, %1 : i32, i32, i32
  }
  func.func @transform_4(%arg0: i32) -> (i32, i32, i32) {
    %c0_i32 = arith.constant 0 : i32
    %c0_i32_0 = arith.constant 0 : i32
    %c0_i32_1 = arith.constant 0 : i32
    %c0_i32_2 = arith.constant 0 : i32
    return %c0_i32, %c0_i32_0, %c0_i32_1 : i32, i32, i32
  }
  func.func @transform_5(%arg0: i32) -> (i32, i32, i32) {
    %c0_i32 = arith.constant 0 : i32
    %c0_i32_0 = arith.constant 0 : i32
    %c0_i32_1 = arith.constant 0 : i32
    %c0_i32_2 = arith.constant 0 : i32
    return %c0_i32, %c0_i32_0, %c0_i32_1 : i32, i32, i32
  }
  func.func @transform_6(%arg0: i32) -> (i32, i32, i32) {
    %c0_i32 = arith.constant 0 : i32
    %c0_i32_0 = arith.constant 0 : i32
    %c0_i32_1 = arith.constant 0 : i32
    %c0_i32_2 = arith.constant 0 : i32
    return %c0_i32, %c0_i32_0, %c0_i32_1 : i32, i32, i32
  }
  func.func @transform_7(%arg0: i32) -> (i32, i32, i32) {
    %c0_i32 = arith.constant 0 : i32
    %c0_i32_0 = arith.constant 0 : i32
    %c0_i32_1 = arith.constant 0 : i32
    %c0_i32_2 = arith.constant 0 : i32
    return %c0_i32, %c0_i32_0, %c0_i32_1 : i32, i32, i32
  }
  func.func @transform_8(%arg0: i32) -> (i32, i32, i32) {
    %c0_i32 = arith.constant 0 : i32
    %c0_i32_0 = arith.constant 0 : i32
    %c0_i32_1 = arith.constant 0 : i32
    return %c0_i32, %c0_i32_0, %arg0 : i32, i32, i32
  }
  func.func @transform_9(%arg0: i32) -> (i32, i32, i32) {
    %c0_i32 = arith.constant 0 : i32
    %c0_i32_0 = arith.constant 0 : i32
    %c0_i32_1 = arith.constant 0 : i32
    return %arg0, %c0_i32, %c0_i32_0 : i32, i32, i32
  }
}

module attributes {stable_mosaic.version = 11 : i64} {
  func.func @_conv1_kernel(%arg0: i32, %arg1: memref<2x4x128xf32, #tpu.memory_space<vmem>>, %arg2: memref<2x4x128xf32, #tpu.memory_space<vmem>>, %arg3: memref<12x4x1xf32, #tpu.memory_space<vmem>>, %arg4: memref<1x4x1xf32, #tpu.memory_space<vmem>>, %arg5: memref<2x4x128xf32, #tpu.memory_space<vmem>>, %arg6: memref<1x4x2xf32, #tpu.memory_space<vmem>>) attributes {dimension_semantics = [#tpu.dimension_semantics<parallel>], iteration_bounds = array<i64: 1>, scalar_prefetch = 0 : i64, scratch_operands = 0 : i64, tpu.core_type = #tpu.core_type<tc>, window_params = [{transform_indices = @transform_0, window_bounds = array<i64: 2, 4, 128>}, {transform_indices = @transform_1, window_bounds = array<i64: 2, 4, 128>}, {pipeline_mode = #tpu.pipeline_mode<synchronous>, transform_indices = @transform_2, window_bounds = array<i64: 12, 4, 1>}, {pipeline_mode = #tpu.pipeline_mode<synchronous>, transform_indices = @transform_3, window_bounds = array<i64: 1, 4, 1>}, {transform_indices = @transform_4, window_bounds = array<i64: 2, 4, 128>}, {transform_indices = @transform_5, window_bounds = array<i64: 1, 4, 2>}]} {
    %c0 = arith.constant 0 : index
    %c0_0 = arith.constant 0 : index
    %c0_1 = arith.constant 0 : index
    %0 = vector.load %arg1[%c0, %c0_0, %c0_1] : memref<2x4x128xf32, #tpu.memory_space<vmem>>, vector<2x4x128xf32>
    %c0_2 = arith.constant 0 : index
    %c0_3 = arith.constant 0 : index
    %c0_4 = arith.constant 0 : index
    %1 = vector.load %arg2[%c0_2, %c0_3, %c0_4] : memref<2x4x128xf32, #tpu.memory_space<vmem>>, vector<2x4x2xf32>
    %2 = tpu.concatenate %0, %1 in 2 : vector<2x4x128xf32>, vector<2x4x2xf32> -> vector<2x4x130xf32>
    %c0_5 = arith.constant 0 : index
    %c0_6 = arith.constant 0 : index
    %c0_7 = arith.constant 0 : index
    %3 = vector.load %arg3[%c0_5, %c0_6, %c0_7] : memref<12x4x1xf32, #tpu.memory_space<vmem>>, vector<12x4x1xf32>
    %cst = arith.constant 0.000000e+00 : f32
    %4 = vector.broadcast %cst : f32 to vector<2x4x128xf32>
    %5 = vector.extract_strided_slice %2 {offsets = [0, 0, 0], sizes = [2, 4, 128], strides = [1, 1, 1]} : vector<2x4x130xf32> to vector<2x4x128xf32>
    %6 = vector.extract_strided_slice %3 {offsets = [0, 0, 0], sizes = [1, 4, 1], strides = [1, 1, 1]} : vector<12x4x1xf32> to vector<1x4x1xf32>
    %7 = vector.shape_cast %6 : vector<1x4x1xf32> to vector<4x1xf32>
    %8 = vector.shape_cast %7 : vector<4x1xf32> to vector<1x4x1xf32>
    %9 = vector.extract_strided_slice %5 {offsets = [0, 0, 0], sizes = [2, 1, 128], strides = [1, 1, 1]} : vector<2x4x128xf32> to vector<2x1x128xf32>
    %10 = vector.broadcast %8 : vector<1x4x1xf32> to vector<2x4x128xf32>
    %11 = vector.broadcast %9 : vector<2x1x128xf32> to vector<2x4x128xf32>
    %12 = arith.mulf %10, %11 : vector<2x4x128xf32>
    %13 = arith.addf %4, %12 : vector<2x4x128xf32>
    %14 = vector.extract_strided_slice %3 {offsets = [1, 0, 0], sizes = [1, 4, 1], strides = [1, 1, 1]} : vector<12x4x1xf32> to vector<1x4x1xf32>
    %15 = vector.shape_cast %14 : vector<1x4x1xf32> to vector<4x1xf32>
    %16 = vector.shape_cast %15 : vector<4x1xf32> to vector<1x4x1xf32>
    %17 = vector.extract_strided_slice %5 {offsets = [0, 1, 0], sizes = [2, 1, 128], strides = [1, 1, 1]} : vector<2x4x128xf32> to vector<2x1x128xf32>
    %18 = vector.broadcast %16 : vector<1x4x1xf32> to vector<2x4x128xf32>
    %19 = vector.broadcast %17 : vector<2x1x128xf32> to vector<2x4x128xf32>
    %20 = arith.mulf %18, %19 : vector<2x4x128xf32>
    %21 = arith.addf %13, %20 : vector<2x4x128xf32>
    %22 = vector.extract_strided_slice %3 {offsets = [2, 0, 0], sizes = [1, 4, 1], strides = [1, 1, 1]} : vector<12x4x1xf32> to vector<1x4x1xf32>
    %23 = vector.shape_cast %22 : vector<1x4x1xf32> to vector<4x1xf32>
    %24 = vector.shape_cast %23 : vector<4x1xf32> to vector<1x4x1xf32>
    %25 = vector.extract_strided_slice %5 {offsets = [0, 2, 0], sizes = [2, 1, 128], strides = [1, 1, 1]} : vector<2x4x128xf32> to vector<2x1x128xf32>
    %26 = vector.broadcast %24 : vector<1x4x1xf32> to vector<2x4x128xf32>
    %27 = vector.broadcast %25 : vector<2x1x128xf32> to vector<2x4x128xf32>
    %28 = arith.mulf %26, %27 : vector<2x4x128xf32>
    %29 = arith.addf %21, %28 : vector<2x4x128xf32>
    %30 = vector.extract_strided_slice %3 {offsets = [3, 0, 0], sizes = [1, 4, 1], strides = [1, 1, 1]} : vector<12x4x1xf32> to vector<1x4x1xf32>
    %31 = vector.shape_cast %30 : vector<1x4x1xf32> to vector<4x1xf32>
    %32 = vector.shape_cast %31 : vector<4x1xf32> to vector<1x4x1xf32>
    %33 = vector.extract_strided_slice %5 {offsets = [0, 3, 0], sizes = [2, 1, 128], strides = [1, 1, 1]} : vector<2x4x128xf32> to vector<2x1x128xf32>
    %34 = vector.broadcast %32 : vector<1x4x1xf32> to vector<2x4x128xf32>
    %35 = vector.broadcast %33 : vector<2x1x128xf32> to vector<2x4x128xf32>
    %36 = arith.mulf %34, %35 : vector<2x4x128xf32>
    %37 = arith.addf %29, %36 : vector<2x4x128xf32>
    %38 = vector.extract_strided_slice %2 {offsets = [0, 0, 1], sizes = [2, 4, 128], strides = [1, 1, 1]} : vector<2x4x130xf32> to vector<2x4x128xf32>
    %39 = vector.extract_strided_slice %3 {offsets = [4, 0, 0], sizes = [1, 4, 1], strides = [1, 1, 1]} : vector<12x4x1xf32> to vector<1x4x1xf32>
    %40 = vector.shape_cast %39 : vector<1x4x1xf32> to vector<4x1xf32>
    %41 = vector.shape_cast %40 : vector<4x1xf32> to vector<1x4x1xf32>
    %42 = vector.extract_strided_slice %38 {offsets = [0, 0, 0], sizes = [2, 1, 128], strides = [1, 1, 1]} : vector<2x4x128xf32> to vector<2x1x128xf32>
    %43 = vector.broadcast %41 : vector<1x4x1xf32> to vector<2x4x128xf32>
    %44 = vector.broadcast %42 : vector<2x1x128xf32> to vector<2x4x128xf32>
    %45 = arith.mulf %43, %44 : vector<2x4x128xf32>
    %46 = arith.addf %37, %45 : vector<2x4x128xf32>
    %47 = vector.extract_strided_slice %3 {offsets = [5, 0, 0], sizes = [1, 4, 1], strides = [1, 1, 1]} : vector<12x4x1xf32> to vector<1x4x1xf32>
    %48 = vector.shape_cast %47 : vector<1x4x1xf32> to vector<4x1xf32>
    %49 = vector.shape_cast %48 : vector<4x1xf32> to vector<1x4x1xf32>
    %50 = vector.extract_strided_slice %38 {offsets = [0, 1, 0], sizes = [2, 1, 128], strides = [1, 1, 1]} : vector<2x4x128xf32> to vector<2x1x128xf32>
    %51 = vector.broadcast %49 : vector<1x4x1xf32> to vector<2x4x128xf32>
    %52 = vector.broadcast %50 : vector<2x1x128xf32> to vector<2x4x128xf32>
    %53 = arith.mulf %51, %52 : vector<2x4x128xf32>
    %54 = arith.addf %46, %53 : vector<2x4x128xf32>
    %55 = vector.extract_strided_slice %3 {offsets = [6, 0, 0], sizes = [1, 4, 1], strides = [1, 1, 1]} : vector<12x4x1xf32> to vector<1x4x1xf32>
    %56 = vector.shape_cast %55 : vector<1x4x1xf32> to vector<4x1xf32>
    %57 = vector.shape_cast %56 : vector<4x1xf32> to vector<1x4x1xf32>
    %58 = vector.extract_strided_slice %38 {offsets = [0, 2, 0], sizes = [2, 1, 128], strides = [1, 1, 1]} : vector<2x4x128xf32> to vector<2x1x128xf32>
    %59 = vector.broadcast %57 : vector<1x4x1xf32> to vector<2x4x128xf32>
    %60 = vector.broadcast %58 : vector<2x1x128xf32> to vector<2x4x128xf32>
    %61 = arith.mulf %59, %60 : vector<2x4x128xf32>
    %62 = arith.addf %54, %61 : vector<2x4x128xf32>
    %63 = vector.extract_strided_slice %3 {offsets = [7, 0, 0], sizes = [1, 4, 1], strides = [1, 1, 1]} : vector<12x4x1xf32> to vector<1x4x1xf32>
    %64 = vector.shape_cast %63 : vector<1x4x1xf32> to vector<4x1xf32>
    %65 = vector.shape_cast %64 : vector<4x1xf32> to vector<1x4x1xf32>
    %66 = vector.extract_strided_slice %38 {offsets = [0, 3, 0], sizes = [2, 1, 128], strides = [1, 1, 1]} : vector<2x4x128xf32> to vector<2x1x128xf32>
    %67 = vector.broadcast %65 : vector<1x4x1xf32> to vector<2x4x128xf32>
    %68 = vector.broadcast %66 : vector<2x1x128xf32> to vector<2x4x128xf32>
    %69 = arith.mulf %67, %68 : vector<2x4x128xf32>
    %70 = arith.addf %62, %69 : vector<2x4x128xf32>
    %71 = vector.extract_strided_slice %2 {offsets = [0, 0, 2], sizes = [2, 4, 128], strides = [1, 1, 1]} : vector<2x4x130xf32> to vector<2x4x128xf32>
    %72 = vector.extract_strided_slice %3 {offsets = [8, 0, 0], sizes = [1, 4, 1], strides = [1, 1, 1]} : vector<12x4x1xf32> to vector<1x4x1xf32>
    %73 = vector.shape_cast %72 : vector<1x4x1xf32> to vector<4x1xf32>
    %74 = vector.shape_cast %73 : vector<4x1xf32> to vector<1x4x1xf32>
    %75 = vector.extract_strided_slice %71 {offsets = [0, 0, 0], sizes = [2, 1, 128], strides = [1, 1, 1]} : vector<2x4x128xf32> to vector<2x1x128xf32>
    %76 = vector.broadcast %74 : vector<1x4x1xf32> to vector<2x4x128xf32>
    %77 = vector.broadcast %75 : vector<2x1x128xf32> to vector<2x4x128xf32>
    %78 = arith.mulf %76, %77 : vector<2x4x128xf32>
    %79 = arith.addf %70, %78 : vector<2x4x128xf32>
    %80 = vector.extract_strided_slice %3 {offsets = [9, 0, 0], sizes = [1, 4, 1], strides = [1, 1, 1]} : vector<12x4x1xf32> to vector<1x4x1xf32>
    %81 = vector.shape_cast %80 : vector<1x4x1xf32> to vector<4x1xf32>
    %82 = vector.shape_cast %81 : vector<4x1xf32> to vector<1x4x1xf32>
    %83 = vector.extract_strided_slice %71 {offsets = [0, 1, 0], sizes = [2, 1, 128], strides = [1, 1, 1]} : vector<2x4x128xf32> to vector<2x1x128xf32>
    %84 = vector.broadcast %82 : vector<1x4x1xf32> to vector<2x4x128xf32>
    %85 = vector.broadcast %83 : vector<2x1x128xf32> to vector<2x4x128xf32>
    %86 = arith.mulf %84, %85 : vector<2x4x128xf32>
    %87 = arith.addf %79, %86 : vector<2x4x128xf32>
    %88 = vector.extract_strided_slice %3 {offsets = [10, 0, 0], sizes = [1, 4, 1], strides = [1, 1, 1]} : vector<12x4x1xf32> to vector<1x4x1xf32>
    %89 = vector.shape_cast %88 : vector<1x4x1xf32> to vector<4x1xf32>
    %90 = vector.shape_cast %89 : vector<4x1xf32> to vector<1x4x1xf32>
    %91 = vector.extract_strided_slice %71 {offsets = [0, 2, 0], sizes = [2, 1, 128], strides = [1, 1, 1]} : vector<2x4x128xf32> to vector<2x1x128xf32>
    %92 = vector.broadcast %90 : vector<1x4x1xf32> to vector<2x4x128xf32>
    %93 = vector.broadcast %91 : vector<2x1x128xf32> to vector<2x4x128xf32>
    %94 = arith.mulf %92, %93 : vector<2x4x128xf32>
    %95 = arith.addf %87, %94 : vector<2x4x128xf32>
    %96 = vector.extract_strided_slice %3 {offsets = [11, 0, 0], sizes = [1, 4, 1], strides = [1, 1, 1]} : vector<12x4x1xf32> to vector<1x4x1xf32>
    %97 = vector.shape_cast %96 : vector<1x4x1xf32> to vector<4x1xf32>
    %98 = vector.shape_cast %97 : vector<4x1xf32> to vector<1x4x1xf32>
    %99 = vector.extract_strided_slice %71 {offsets = [0, 3, 0], sizes = [2, 1, 128], strides = [1, 1, 1]} : vector<2x4x128xf32> to vector<2x1x128xf32>
    %100 = vector.broadcast %98 : vector<1x4x1xf32> to vector<2x4x128xf32>
    %101 = vector.broadcast %99 : vector<2x1x128xf32> to vector<2x4x128xf32>
    %102 = arith.mulf %100, %101 : vector<2x4x128xf32>
    %103 = arith.addf %95, %102 : vector<2x4x128xf32>
    %c0_8 = arith.constant 0 : index
    %c0_9 = arith.constant 0 : index
    %c0_10 = arith.constant 0 : index
    %104 = vector.load %arg4[%c0_8, %c0_9, %c0_10] : memref<1x4x1xf32, #tpu.memory_space<vmem>>, vector<1x4x1xf32>
    %105 = vector.broadcast %104 : vector<1x4x1xf32> to vector<2x4x128xf32>
    %106 = arith.addf %103, %105 : vector<2x4x128xf32>
    %c0_11 = arith.constant 0 : index
    %c0_12 = arith.constant 0 : index
    %c0_13 = arith.constant 0 : index
    %107 = vector.load %arg5[%c0_11, %c0_12, %c0_13] : memref<2x4x128xf32, #tpu.memory_space<vmem>>, vector<2x4x128xf32>
    tpu.vector_store %arg5[%c0_11, %c0_12, %c0_13], %106 {strides = array<i32>} : memref<2x4x128xf32, #tpu.memory_space<vmem>>, vector<2x4x128xf32>,
    %108 = tpu.iota {dimensions = array<i32: 2>} : vector<1x1x128xi32>
    %c128_i32 = arith.constant 128 : i32
    %109 = arith.muli %arg0, %c128_i32 : i32
    %110 = vector.broadcast %109 : i32 to vector<1x1x128xi32>
    %111 = arith.addi %110, %108 : vector<1x1x128xi32>
    %c16_i32 = arith.constant 16 : i32
    %112 = vector.broadcast %c16_i32 : i32 to vector<1x1x128xi32>
    %113 = arith.cmpi slt, %111, %112 : vector<1x1x128xi32>
    %114 = arith.extui %113 : vector<1x1x128xi1> to vector<1x1x128xi32>
    %115 = arith.sitofp %114 : vector<1x1x128xi32> to vector<1x1x128xf32>
    %116 = vector.broadcast %115 : vector<1x1x128xf32> to vector<2x4x128xf32>
    %117 = arith.mulf %106, %116 : vector<2x4x128xf32>
    %cst_14 = arith.constant dense<0.000000e+00> : vector<4x128xf32>
    %118 = vector.multi_reduction <add>, %117, %cst_14 [0] : vector<2x4x128xf32> to vector<4x128xf32>
    %cst_15 = arith.constant dense<0.000000e+00> : vector<4xf32>
    %119 = vector.multi_reduction <add>, %118, %cst_15 [1] : vector<4x128xf32> to vector<4xf32>
    %120 = vector.shape_cast %119 : vector<4xf32> to vector<4x1xf32>
    %c0_16 = arith.constant 0 : index
    %c0_17 = arith.constant 0 : index
    %c0_18 = arith.constant 0 : index
    %121 = vector.load %arg6[%c0_16, %c0_17, %c0_18] : memref<1x4x2xf32, #tpu.memory_space<vmem>>, vector<1x4x1xf32>
    %122 = vector.shape_cast %121 : vector<1x4x1xf32> to vector<4x1xf32>
    %123 = vector.shape_cast %120 : vector<4x1xf32> to vector<1x4x1xf32>
    tpu.vector_store %arg6[%c0_16, %c0_17, %c0_18], %123 {strides = array<i32>} : memref<1x4x2xf32, #tpu.memory_space<vmem>>, vector<1x4x1xf32>,
    %124 = arith.mulf %117, %117 : vector<2x4x128xf32>
    %cst_19 = arith.constant dense<0.000000e+00> : vector<4x128xf32>
    %125 = vector.multi_reduction <add>, %124, %cst_19 [0] : vector<2x4x128xf32> to vector<4x128xf32>
    %cst_20 = arith.constant dense<0.000000e+00> : vector<4xf32>
    %126 = vector.multi_reduction <add>, %125, %cst_20 [1] : vector<4x128xf32> to vector<4xf32>
    %127 = vector.shape_cast %126 : vector<4xf32> to vector<4x1xf32>
    %c0_21 = arith.constant 0 : index
    %c0_22 = arith.constant 0 : index
    %c1 = arith.constant 1 : index
    %128 = vector.load %arg6[%c0_21, %c0_22, %c1] : memref<1x4x2xf32, #tpu.memory_space<vmem>>, vector<1x4x1xf32>
    %129 = vector.shape_cast %128 : vector<1x4x1xf32> to vector<4x1xf32>
    %130 = vector.shape_cast %127 : vector<4x1xf32> to vector<1x4x1xf32>
    tpu.vector_store %arg6[%c0_21, %c0_22, %c1], %130 {strides = array<i32>} : memref<1x4x2xf32, #tpu.memory_space<vmem>>, vector<1x4x1xf32>,
    return
  }
  func.func @transform_0(%arg0: i32) -> (i32, i32, i32) {
    %c0_i32 = arith.constant 0 : i32
    %c0_i32_0 = arith.constant 0 : i32
    %c0_i32_1 = arith.constant 0 : i32
    return %c0_i32, %c0_i32_0, %arg0 : i32, i32, i32
  }
  func.func @transform_1(%arg0: i32) -> (i32, i32, i32) {
    %c1_i32 = arith.constant 1 : i32
    %0 = arith.addi %arg0, %c1_i32 : i32
    %c1_i32_0 = arith.constant 1 : i32
    %1 = arith.muli %0, %c1_i32_0 : i32
    %c0_i32 = arith.constant 0 : i32
    %c0_i32_1 = arith.constant 0 : i32
    %c0_i32_2 = arith.constant 0 : i32
    return %c0_i32, %c0_i32_1, %1 : i32, i32, i32
  }
  func.func @transform_2(%arg0: i32) -> (i32, i32, i32) {
    %c0_i32 = arith.constant 0 : i32
    %c0_i32_0 = arith.constant 0 : i32
    %c0_i32_1 = arith.constant 0 : i32
    %c0_i32_2 = arith.constant 0 : i32
    return %c0_i32, %c0_i32_0, %c0_i32_1 : i32, i32, i32
  }
  func.func @transform_3(%arg0: i32) -> (i32, i32, i32) {
    %c0_i32 = arith.constant 0 : i32
    %c0_i32_0 = arith.constant 0 : i32
    %c0_i32_1 = arith.constant 0 : i32
    %c0_i32_2 = arith.constant 0 : i32
    return %c0_i32, %c0_i32_0, %c0_i32_1 : i32, i32, i32
  }
  func.func @transform_4(%arg0: i32) -> (i32, i32, i32) {
    %c0_i32 = arith.constant 0 : i32
    %c0_i32_0 = arith.constant 0 : i32
    %c0_i32_1 = arith.constant 0 : i32
    return %c0_i32, %c0_i32_0, %arg0 : i32, i32, i32
  }
  func.func @transform_5(%arg0: i32) -> (i32, i32, i32) {
    %c0_i32 = arith.constant 0 : i32
    %c0_i32_0 = arith.constant 0 : i32
    %c0_i32_1 = arith.constant 0 : i32
    return %arg0, %c0_i32, %c0_i32_0 : i32, i32, i32
  }
}

module attributes {stable_mosaic.version = 11 : i64} {
  func.func @_bn_relu_kernel(%arg0: i32, %arg1: memref<2x8x128xf32, #tpu.memory_space<vmem>>, %arg2: memref<1x8x1xf32, #tpu.memory_space<vmem>>, %arg3: memref<1x8x1xf32, #tpu.memory_space<vmem>>, %arg4: memref<2x8x128xf32, #tpu.memory_space<vmem>>) attributes {dimension_semantics = [#tpu.dimension_semantics<parallel>], iteration_bounds = array<i64: 1>, scalar_prefetch = 0 : i64, scratch_operands = 0 : i64, tpu.core_type = #tpu.core_type<tc>, window_params = [{transform_indices = @transform_0, window_bounds = array<i64: 2, 8, 128>}, {pipeline_mode = #tpu.pipeline_mode<synchronous>, transform_indices = @transform_1, window_bounds = array<i64: 1, 8, 1>}, {pipeline_mode = #tpu.pipeline_mode<synchronous>, transform_indices = @transform_2, window_bounds = array<i64: 1, 8, 1>}, {transform_indices = @transform_3, window_bounds = array<i64: 2, 8, 128>}]} {
    %c0 = arith.constant 0 : index
    %c0_0 = arith.constant 0 : index
    %c0_1 = arith.constant 0 : index
    %0 = vector.load %arg1[%c0, %c0_0, %c0_1] : memref<2x8x128xf32, #tpu.memory_space<vmem>>, vector<2x8x128xf32>
    %c0_2 = arith.constant 0 : index
    %c0_3 = arith.constant 0 : index
    %c0_4 = arith.constant 0 : index
    %1 = vector.load %arg2[%c0_2, %c0_3, %c0_4] : memref<1x8x1xf32, #tpu.memory_space<vmem>>, vector<1x8x1xf32>
    %2 = vector.broadcast %1 : vector<1x8x1xf32> to vector<2x8x128xf32>
    %3 = arith.mulf %0, %2 : vector<2x8x128xf32>
    %c0_5 = arith.constant 0 : index
    %c0_6 = arith.constant 0 : index
    %c0_7 = arith.constant 0 : index
    %4 = vector.load %arg3[%c0_5, %c0_6, %c0_7] : memref<1x8x1xf32, #tpu.memory_space<vmem>>, vector<1x8x1xf32>
    %5 = vector.broadcast %4 : vector<1x8x1xf32> to vector<2x8x128xf32>
    %6 = arith.addf %3, %5 : vector<2x8x128xf32>
    %cst = arith.constant 0.000000e+00 : f32
    %7 = vector.broadcast %cst : f32 to vector<2x8x128xf32>
    %8 = arith.maximumf %6, %7 : vector<2x8x128xf32>
    %c0_8 = arith.constant 0 : index
    %c0_9 = arith.constant 0 : index
    %c0_10 = arith.constant 0 : index
    %9 = vector.load %arg4[%c0_8, %c0_9, %c0_10] : memref<2x8x128xf32, #tpu.memory_space<vmem>>, vector<2x8x128xf32>
    tpu.vector_store %arg4[%c0_8, %c0_9, %c0_10], %8 {strides = array<i32>} : memref<2x8x128xf32, #tpu.memory_space<vmem>>, vector<2x8x128xf32>,
    return
  }
  func.func @transform_0(%arg0: i32) -> (i32, i32, i32) {
    %c0_i32 = arith.constant 0 : i32
    %c0_i32_0 = arith.constant 0 : i32
    %c0_i32_1 = arith.constant 0 : i32
    return %c0_i32, %c0_i32_0, %arg0 : i32, i32, i32
  }
  func.func @transform_1(%arg0: i32) -> (i32, i32, i32) {
    %c0_i32 = arith.constant 0 : i32
    %c0_i32_0 = arith.constant 0 : i32
    %c0_i32_1 = arith.constant 0 : i32
    %c0_i32_2 = arith.constant 0 : i32
    return %c0_i32, %c0_i32_0, %c0_i32_1 : i32, i32, i32
  }
  func.func @transform_2(%arg0: i32) -> (i32, i32, i32) {
    %c0_i32 = arith.constant 0 : i32
    %c0_i32_0 = arith.constant 0 : i32
    %c0_i32_1 = arith.constant 0 : i32
    %c0_i32_2 = arith.constant 0 : i32
    return %c0_i32, %c0_i32_0, %c0_i32_1 : i32, i32, i32
  }
  func.func @transform_3(%arg0: i32) -> (i32, i32, i32) {
    %c0_i32 = arith.constant 0 : i32
    %c0_i32_0 = arith.constant 0 : i32
    %c0_i32_1 = arith.constant 0 : i32
    return %c0_i32, %c0_i32_0, %arg0 : i32, i32, i32
  }
}

</mosaic_0001>

<llo_original>
// kernel: res_convblock.5
$region0: #{res_convblock.5}
  #allocation0 [shape = 'u32[]', space=smem, size = 0x4, offset = 0x4, fixed_abs, tag = 'smem constant byte address 0x4 - core index']
  #allocation1 [shape = 'u32[144,128]{1,0:T(1,128)}', space=vmem, size = 0x12000, scoped, tag = 'internal scratch']
  %s0 = inlined_call_operand.vmem [shape: f32[2,8,128], index: 0, kind: input, shape index: {}]
  %s1 = inlined_call_operand.vmem [shape: f32[1,8,1], index: 1, kind: input, shape index: {}]
  %s2 = inlined_call_operand.vmem [shape: f32[1,8,1], index: 2, kind: input, shape index: {}]
  %s3 = inlined_call_operand.hbm [shape: f32[2,8,128], index: 3, kind: output, shape index: {}]
  %s4 = sld [smem:[#allocation0]]
  $region22: #{res_convblock.5} parent=0
    _
  %s6 = ssub.s32 1, %s4
  %s7 = scalar_select 0, %s6, %s4
  $region1: #{res_convblock.5} parent=0
    #allocation2 [shape = 'u8[8192]{0}', space=vmem, size = 0x2000, scoped, tag = 'output window, operand 0, single buffered']
    #allocation3 [shape = 's32[1]{0}', space=sflag, size = 0x4, scoped, tag = 'scoped memory for res_convblock.5']
    %8 = vsyncpa [#allocation3], 0
    // Predicated region
    $region2: #{res_convblock.5} parent=1 // pred_check
      _
    $region3: #{res_convblock.5} parent=1 // pred_check_branch
      %10 = sbr.rel (0) target = $region5
    $region4: #{res_convblock.5} parent=1 // pred_region
      _
    $region5: #{res_convblock.5} parent=1 // pred_fallthru
      _
    // Predicated region
    $region6: #{res_convblock.5} parent=1 // pred_check
      _
    $region7: #{res_convblock.5} parent=1 // pred_check_branch
      %12 = sbr.rel (0) target = $region9
    $region8: #{res_convblock.5} parent=1 // pred_region
      _
    $region9: #{res_convblock.5} parent=1 // pred_fallthru
      _
    // Predicated region
    $region10: #{res_convblock.5} parent=1 // pred_check
      _
    $region11: #{res_convblock.5} parent=1 // pred_check_branch
      %14 = sbr.rel (0) target = $region13
    $region12: #{res_convblock.5} parent=1 // pred_region
      _
    $region13: #{res_convblock.5} parent=1 // pred_fallthru
      _
    %v15 = vld [vmem:[%s0] sm:$0xff]
    %v16 = vld [vmem:[%s0 + $0x8] sm:$0xff]
    %v17 = vld [vmem:[%s1] sm:$0xff]
    %19 = vset.pattern.permute.xlu0 0
    %20 = vperm.xlu0 %19, %v17
    %v21 = vpop.permute.xlu0 %20
    %v23 = vmul.f32 %v15, %v21
    %v24 = vmul.f32 %v16, %v21
    %v25 = vld [vmem:[%s2] sm:$0xff]
    %27 = vset.pattern.permute.xlu0 0
    %28 = vperm.xlu0 %27, %v25
    %v29 = vpop.permute.xlu0 %28
    %v31 = vadd.f32 %v23, %v29
    %v32 = vadd.f32 %v24, %v29
    %v33 = vmax.f32 %v31, 0.0
    %v34 = vmax.f32 %v32, 0.0
    %35 = vst [vmem:[#allocation2] sm:$0xff] %v33
    %36 = vst [vmem:[#allocation2 + $0x8] sm:$0xff] %v34
    // Predicated region
    $region14: #{res_convblock.5} parent=1 // pred_check
      _
    $region15: #{res_convblock.5} parent=1 // pred_check_branch
      %38 = sbr.rel (0) target = $region17
    $region16: #{res_convblock.5} parent=1 // pred_region
      %s40 = ssub.s32 256, 256
      %41 = vsyncadd [#allocation3], %s40
      %s42 = sshll.u32 [#allocation2], 4
      %s43 = int_to_ptr.vmem [resolvable:$true] %s42
      %48 = dma.vmem_to_hbm [thread:$0]  %s43, 256, %s3, [#allocation3], 128, 128, 8
    $region17: #{res_convblock.5} parent=1 // pred_fallthru
      _
    // Predicated region
    $region18: #{res_convblock.5} parent=1 // pred_check
      _
    $region19: #{res_convblock.5} parent=1 // pred_check_branch
      %50 = sbr.rel (0) target = $region21
    $region20: #{res_convblock.5} parent=1 // pred_region
      %51 = dma.done [#allocation3], 256
    $region21: #{res_convblock.5} parent=1 // pred_fallthru
      _
    %52 = vsyncpa [#allocation3], 1

// kernel: res_convblock.3
$region0: #{res_convblock.3}
  #allocation0 [shape = 'u32[]', space=smem, size = 0x4, offset = 0x4, fixed_abs, tag = 'smem constant byte address 0x4 - core index']
  #allocation1 [shape = 'u32[144,128]{1,0:T(1,128)}', space=vmem, size = 0x12000, scoped, tag = 'internal scratch']
  %s0 = inlined_call_operand.vmem [shape: f32[2,4,256], index: 0, kind: input, shape index: {}, may-alias: {0,1}]
  %s1 = inlined_call_operand.vmem [shape: f32[2,4,256], index: 1, kind: input, shape index: {}, may-alias: {0,1}]
  %s2 = inlined_call_operand.vmem [shape: f32[12,4,1], index: 2, kind: input, shape index: {}]
  %s3 = inlined_call_operand.vmem [shape: f32[1,4,1], index: 3, kind: input, shape index: {}]
  %s4 = inlined_call_operand.vmem [shape: f32[2,4,128], index: 4, kind: output, shape index: {0}]
  %s5 = inlined_call_operand.vmem [shape: f32[1,4,2], index: 5, kind: output, shape index: {1}]
  %6 = xla_tuple %s4, %s5
  %s7 = sld [smem:[#allocation0]]
  $region116: #{res_convblock.3} parent=0
    _
  %s9 = ssub.s32 1, %s7
  %s10 = scalar_select 0, %s9, %s7
  $region1: #{res_convblock.3} parent=0
    #allocation2 [shape = 'u8[4096]{0}', space=vmem, size = 0x1000, scoped, tag = 'input window, operand 0, single buffered']
    #allocation3 [shape = 'u8[4096]{0}', space=vmem, size = 0x1000, scoped, tag = 'input window, operand 1, single buffered']
    // Predicated region
    $region2: #{res_convblock.3} parent=1 // pred_check
      _
    $region3: #{res_convblock.3} parent=1 // pred_check_branch
      %12 = sbr.rel (0) target = $region5
    $region4: #{res_convblock.3} parent=1 // pred_region
      // Predicated region
      $region6: #{res_convblock.3} parent=4 // pred_check
        _
      $region7: #{res_convblock.3} parent=4 // pred_check_branch
        %14 = sbr.rel (0) target = $region9
      $region8: #{res_convblock.3} parent=4 // pred_region
        // Predicated region
        $region10: #{res_convblock.3} parent=8 // pred_check
          _
        $region11: #{res_convblock.3} parent=8 // pred_check_branch
          %16 = sbr.rel target = $region13
        $region12: #{res_convblock.3} parent=8 // pred_region
          // Predicated region
          $region25: #{res_convblock.3} parent=12 // pred_check
            _
          $region26: #{res_convblock.3} parent=12 // pred_check_branch
            %34 = sbr.rel (0) target = $region28
          $region27: #{res_convblock.3} parent=12 // pred_region
            loop: start=0, step=1, limit=1
            $region29: #{res_convblock.3} parent=27 // loop_pre_header
              _
            $region30: #{res_convblock.3} parent=27 // loop_header
              %s36 = sphi 0, %s40
              %p37 = scmp.ge.s32.totalorder %s36, 1
              %s41 = sphi %s0, %s0
              %s42 = sphi [#allocation2], [#allocation2]
            $region31: #{res_convblock.3} parent=27 // loop_header_branch
              %39 = sbr.rel (%p37) target = $region35
            $region32: #{res_convblock.3} parent=27 // loop_body
              _
            $region33: #{res_convblock.3} parent=27 // loop_footer
              %s40 = sadd.s32 1, %s36
            $region34: #{res_convblock.3} parent=27 // loop_footer_branch
              %35 = sbr.rel target = $region30
            $region35: #{res_convblock.3} parent=27 // loop_exit
              _
            %s44 = ssub.s32 16, 1
            loop: start=0, step=1, limit=1
            $region36: #{res_convblock.3} parent=27 // loop_pre_header
              _
            $region37: #{res_convblock.3} parent=27 // loop_header
              %s46 = sphi 0, %s50
              %p47 = scmp.ge.s32.totalorder %s46, 1
              %s51 = sphi %s0, %s0
              %s52 = sphi [#allocation2], [#allocation2]
            $region38: #{res_convblock.3} parent=27 // loop_header_branch
              %49 = sbr.rel (%p47) target = $region42
            $region39: #{res_convblock.3} parent=27 // loop_body
              %v53 = vld [vmem:[%s51] sm:%s44]
              %54 = vst [vmem:[%s52] sm:%s44] %v53
              %v55 = vld [vmem:[%s51 + $0x8] sm:%s44]
              %56 = vst [vmem:[%s52 + $0x4] sm:%s44] %v55
            $region40: #{res_convblock.3} parent=27 // loop_footer
              %s50 = sadd.s32 1, %s46
            $region41: #{res_convblock.3} parent=27 // loop_footer_branch
              %45 = sbr.rel target = $region37
            $region42: #{res_convblock.3} parent=27 // loop_exit
              _
          $region28: #{res_convblock.3} parent=12 // pred_fallthru
            _
        $region13: #{res_convblock.3} parent=8 // pred_fallthru
          _
        // Predicated region
        $region14: #{res_convblock.3} parent=8 // pred_check
          _
        $region15: #{res_convblock.3} parent=8 // pred_check_branch
          %18 = sbr.rel (0) target = $region17
        $region16: #{res_convblock.3} parent=8 // pred_region
          %s20 = ssub.s32 16, 1
          loop: start=0, step=1, limit=1
          $region18: #{res_convblock.3} parent=16 // loop_pre_header
            _
          $region19: #{res_convblock.3} parent=16 // loop_header
            %s22 = sphi 0, %s26
            %p23 = scmp.ge.s32.totalorder %s22, 1
            %s27 = sphi %s0, %s0
            %s28 = sphi [#allocation2], [#allocation2]
          $region20: #{res_convblock.3} parent=16 // loop_header_branch
            %25 = sbr.rel (%p23) target = $region24
          $region21: #{res_convblock.3} parent=16 // loop_body
            %v29 = vld [vmem:[%s27] sm:%s20]
            %30 = vst [vmem:[%s28] sm:%s20] %v29
            %v31 = vld [vmem:[%s27 + $0x8] sm:%s20]
            %32 = vst [vmem:[%s28 + $0x4] sm:%s20] %v31
          $region22: #{res_convblock.3} parent=16 // loop_footer
            %s26 = sadd.s32 1, %s22
          $region23: #{res_convblock.3} parent=16 // loop_footer_branch
            %21 = sbr.rel target = $region19
          $region24: #{res_convblock.3} parent=16 // loop_exit
            _
        $region17: #{res_convblock.3} parent=8 // pred_fallthru
          _
      $region9: #{res_convblock.3} parent=4 // pred_fallthru
        _
      %57 = vnop
    $region5: #{res_convblock.3} parent=1 // pred_fallthru
      _
    // Predicated region
    $region43: #{res_convblock.3} parent=1 // pred_check
      _
    $region44: #{res_convblock.3} parent=1 // pred_check_branch
      %59 = sbr.rel (0) target = $region46
    $region45: #{res_convblock.3} parent=1 // pred_region
      %s60 = sadd.s32 0, 1
      %s61 = smul.addr %s60, 4
      %s62 = scalar_lea.vmem %s1, %s61
      // Predicated region
      $region47: #{res_convblock.3} parent=45 // pred_check
        _
      $region48: #{res_convblock.3} parent=45 // pred_check_branch
        %64 = sbr.rel (0) target = $region50
      $region49: #{res_convblock.3} parent=45 // pred_region
        // Predicated region
        $region51: #{res_convblock.3} parent=49 // pred_check
          _
        $region52: #{res_convblock.3} parent=49 // pred_check_branch
          %66 = sbr.rel target = $region54
        $region53: #{res_convblock.3} parent=49 // pred_region
          // Predicated region
          $region66: #{res_convblock.3} parent=53 // pred_check
            _
          $region67: #{res_convblock.3} parent=53 // pred_check_branch
            %84 = sbr.rel (0) target = $region69
          $region68: #{res_convblock.3} parent=53 // pred_region
            loop: start=0, step=1, limit=1
            $region70: #{res_convblock.3} parent=68 // loop_pre_header
              _
            $region71: #{res_convblock.3} parent=68 // loop_header
              %s86 = sphi 0, %s90
              %p87 = scmp.ge.s32.totalorder %s86, 1
              %s91 = sphi %s62, %s62
              %s92 = sphi [#allocation3], [#allocation3]
            $region72: #{res_convblock.3} parent=68 // loop_header_branch
              %89 = sbr.rel (%p87) target = $region76
            $region73: #{res_convblock.3} parent=68 // loop_body
              _
            $region74: #{res_convblock.3} parent=68 // loop_footer
              %s90 = sadd.s32 1, %s86
            $region75: #{res_convblock.3} parent=68 // loop_footer_branch
              %85 = sbr.rel target = $region71
            $region76: #{res_convblock.3} parent=68 // loop_exit
              _
            %s94 = ssub.s32 16, 1
            loop: start=0, step=1, limit=1
            $region77: #{res_convblock.3} parent=68 // loop_pre_header
              _
            $region78: #{res_convblock.3} parent=68 // loop_header
              %s96 = sphi 0, %s100
              %p97 = scmp.ge.s32.totalorder %s96, 1
              %s101 = sphi %s62, %s62
              %s102 = sphi [#allocation3], [#allocation3]
            $region79: #{res_convblock.3} parent=68 // loop_header_branch
              %99 = sbr.rel (%p97) target = $region83
            $region80: #{res_convblock.3} parent=68 // loop_body
              %v103 = vld [vmem:[%s101] sm:%s94]
              %104 = vst [vmem:[%s102] sm:%s94] %v103
              %v105 = vld [vmem:[%s101 + $0x8] sm:%s94]
              %106 = vst [vmem:[%s102 + $0x4] sm:%s94] %v105
            $region81: #{res_convblock.3} parent=68 // loop_footer
              %s100 = sadd.s32 1, %s96
            $region82: #{res_convblock.3} parent=68 // loop_footer_branch
              %95 = sbr.rel target = $region78
            $region83: #{res_convblock.3} parent=68 // loop_exit
              _
          $region69: #{res_convblock.3} parent=53 // pred_fallthru
            _
        $region54: #{res_convblock.3} parent=49 // pred_fallthru
          _
        // Predicated region
        $region55: #{res_convblock.3} parent=49 // pred_check
          _
        $region56: #{res_convblock.3} parent=49 // pred_check_branch
          %68 = sbr.rel (0) target = $region58
        $region57: #{res_convblock.3} parent=49 // pred_region
          %s70 = ssub.s32 16, 1
          loop: start=0, step=1, limit=1
          $region59: #{res_convblock.3} parent=57 // loop_pre_header
            _
          $region60: #{res_convblock.3} parent=57 // loop_header
            %s72 = sphi 0, %s76
            %p73 = scmp.ge.s32.totalorder %s72, 1
            %s77 = sphi %s62, %s62
            %s78 = sphi [#allocation3], [#allocation3]
          $region61: #{res_convblock.3} parent=57 // loop_header_branch
            %75 = sbr.rel (%p73) target = $region65
          $region62: #{res_convblock.3} parent=57 // loop_body
            %v79 = vld [vmem:[%s77] sm:%s70]
            %80 = vst [vmem:[%s78] sm:%s70] %v79
            %v81 = vld [vmem:[%s77 + $0x8] sm:%s70]
            %82 = vst [vmem:[%s78 + $0x4] sm:%s70] %v81
          $region63: #{res_convblock.3} parent=57 // loop_footer
            %s76 = sadd.s32 1, %s72
          $region64: #{res_convblock.3} parent=57 // loop_footer_branch
            %71 = sbr.rel target = $region60
          $region65: #{res_convblock.3} parent=57 // loop_exit
            _
        $region58: #{res_convblock.3} parent=49 // pred_fallthru
          _
      $region50: #{res_convblock.3} parent=45 // pred_fallthru
        _
      %107 = vnop
    $region46: #{res_convblock.3} parent=1 // pred_fallthru
      _
    // Predicated region
    $region84: #{res_convblock.3} parent=1 // pred_check
      _
    $region85: #{res_convblock.3} parent=1 // pred_check_branch
      %109 = sbr.rel (0) target = $region87
    $region86: #{res_convblock.3} parent=1 // pred_region
      _
    $region87: #{res_convblock.3} parent=1 // pred_fallthru
      _
    // Predicated region
    $region88: #{res_convblock.3} parent=1 // pred_check
      _
    $region89: #{res_convblock.3} parent=1 // pred_check_branch
      %111 = sbr.rel (0) target = $region91
    $region90: #{res_convblock.3} parent=1 // pred_region
      _
    $region91: #{res_convblock.3} parent=1 // pred_fallthru
      _
    // Predicated region
    $region92: #{res_convblock.3} parent=1 // pred_check
      _
    $region93: #{res_convblock.3} parent=1 // pred_check_branch
      %113 = sbr.rel (0) target = $region95
    $region94: #{res_convblock.3} parent=1 // pred_region
      _
    $region95: #{res_convblock.3} parent=1 // pred_fallthru
      _
    // Predicated region
    $region96: #{res_convblock.3} parent=1 // pred_check
      _
    $region97: #{res_convblock.3} parent=1 // pred_check_branch
      %115 = sbr.rel (0) target = $region99
    $region98: #{res_convblock.3} parent=1 // pred_region
      _
    $region99: #{res_convblock.3} parent=1 // pred_fallthru
      _
    %s116 = sadd.s32 0, 1
    %v117 = vld [vmem:[#allocation2] sm:$0xf]
    %v118 = vld [vmem:[#allocation2 + $0x4] sm:$0xf]
    %v119 = vld [vmem:[#allocation3] sm:$0xf]
    %v120 = vld [vmem:[#allocation3 + $0x4] sm:$0xf]
    %v121 = vld [vmem:[%s2] sm:$0xf]
    %v122 = vld [vmem:[%s2 + $0x4] sm:$0xf]
    %v123 = vld [vmem:[%s2 + $0x8] sm:$0xf]
    %v124 = vld [vmem:[%s2 + $0xc] sm:$0xf]
    %v125 = vld [vmem:[%s2 + $0x10] sm:$0xf]
    %v126 = vld [vmem:[%s2 + $0x14] sm:$0xf]
    %v127 = vld [vmem:[%s2 + $0x18] sm:$0xf]
    %v128 = vld [vmem:[%s2 + $0x1c] sm:$0xf]
    %v129 = vld [vmem:[%s2 + $0x20] sm:$0xf]
    %v130 = vld [vmem:[%s2 + $0x24] sm:$0xf]
    %v131 = vld [vmem:[%s2 + $0x28] sm:$0xf]
    %v132 = vld [vmem:[%s2 + $0x2c] sm:$0xf]
    %134 = vset.pattern.permute.xlu0 0
    %135 = vperm.xlu0 %134, %v121
    %v136 = vpop.permute.xlu0 %135
    %v138 = vlaneseq
    %v139 = vshrl.u32 %v138, 7
    %v140 = vsub.s32 0, %v139
    %v141 = vrot.slane %v117, %v140
    %v142 = vlaneseq
    %v143 = vshrl.u32 %v142, 7
    %v144 = vsub.s32 0, %v143
    %v145 = vrot.slane %v118, %v144
    %v146 = vmul.f32 %v136, %v141
    %v147 = vmul.f32 %v136, %v145
    %v148 = vadd.f32 %v146, 0.0
    %v149 = vadd.f32 %v147, 0.0
    %151 = vset.pattern.permute.xlu0 0
    %152 = vperm.xlu0 %151, %v122
    %v153 = vpop.permute.xlu0 %152
    %v155 = vlaneseq
    %v156 = vshrl.u32 %v155, 7
    %v157 = vsub.s32 1, %v156
    %v158 = vrot.slane %v117, %v157
    %v159 = vlaneseq
    %v160 = vshrl.u32 %v159, 7
    %v161 = vsub.s32 1, %v160
    %v162 = vrot.slane %v118, %v161
    %v163 = vmul.f32 %v153, %v158
    %v164 = vmul.f32 %v153, %v162
    %v165 = vadd.f32 %v148, %v163
    %v166 = vadd.f32 %v149, %v164
    %168 = vset.pattern.permute.xlu0 0
    %169 = vperm.xlu0 %168, %v123
    %v170 = vpop.permute.xlu0 %169
    %v172 = vlaneseq
    %v173 = vshrl.u32 %v172, 7
    %v174 = vsub.s32 2, %v173
    %v175 = vrot.slane %v117, %v174
    %v176 = vlaneseq
    %v177 = vshrl.u32 %v176, 7
    %v178 = vsub.s32 2, %v177
    %v179 = vrot.slane %v118, %v178
    %v180 = vmul.f32 %v170, %v175
    %v181 = vmul.f32 %v170, %v179
    %v182 = vadd.f32 %v165, %v180
    %v183 = vadd.f32 %v166, %v181
    %185 = vset.pattern.permute.xlu0 0
    %186 = vperm.xlu0 %185, %v124
    %v187 = vpop.permute.xlu0 %186
    %v189 = vlaneseq
    %v190 = vshrl.u32 %v189, 7
    %v191 = vsub.s32 3, %v190
    %v192 = vrot.slane %v117, %v191
    %v193 = vlaneseq
    %v194 = vshrl.u32 %v193, 7
    %v195 = vsub.s32 3, %v194
    %v196 = vrot.slane %v118, %v195
    %v197 = vmul.f32 %v187, %v192
    %v198 = vmul.f32 %v187, %v196
    %v199 = vadd.f32 %v182, %v197
    %v200 = vadd.f32 %v183, %v198
    %202 = vset.pattern.permute.xlu0 0
    %203 = vperm.xlu0 %202, %v125
    %v204 = vpop.permute.xlu0 %203
    %v206 = vlaneseq
    %v207 = vshrl.u32 %v206, 7
    %v208 = vsub.s32 0, %v207
    %v209 = vrot.slane %v119, %v208
    %v210 = vlaneseq
    %v211 = vshrl.u32 %v210, 7
    %v212 = vsub.s32 0, %v211
    %v213 = vrot.slane %v120, %v212
    %v214 = vmul.f32 %v204, %v141
    %v215 = vmul.f32 %v204, %v209
    %v216 = vmul.f32 %v204, %v145
    %v217 = vmul.f32 %v204, %v213
    %222 = vrot.lane.b32.xlu0 %v214, 127
    %v223 = vpop.permute.xlu0 %222
    %224 = vrot.lane.b32.xlu0 %v215, 127
    %v225 = vpop.permute.xlu0 %224
    %226 = vrot.lane.b32.xlu0 %v216, 127
    %v227 = vpop.permute.xlu0 %226
    %228 = vrot.lane.b32.xlu0 %v217, 127
    %v229 = vpop.permute.xlu0 %228
    %vm230 = vcmask 1039360
    %v231 = vsel %vm230, %v223, %v225
    %v232 = vsel %vm230, %v227, %v229
    %v235 = vadd.f32 %v199, %v231
    %v236 = vadd.f32 %v200, %v232
    %238 = vset.pattern.permute.xlu0 0
    %239 = vperm.xlu0 %238, %v126
    %v240 = vpop.permute.xlu0 %239
    %v242 = vlaneseq
    %v243 = vshrl.u32 %v242, 7
    %v244 = vsub.s32 1, %v243
    %v245 = vrot.slane %v119, %v244
    %v246 = vlaneseq
    %v247 = vshrl.u32 %v246, 7
    %v248 = vsub.s32 1, %v247
    %v249 = vrot.slane %v120, %v248
    %v250 = vmul.f32 %v240, %v158
    %v251 = vmul.f32 %v240, %v245
    %v252 = vmul.f32 %v240, %v162
    %v253 = vmul.f32 %v240, %v249
    %258 = vrot.lane.b32.xlu0 %v250, 127
    %v259 = vpop.permute.xlu0 %258
    %260 = vrot.lane.b32.xlu0 %v251, 127
    %v261 = vpop.permute.xlu0 %260
    %262 = vrot.lane.b32.xlu0 %v252, 127
    %v263 = vpop.permute.xlu0 %262
    %264 = vrot.lane.b32.xlu0 %v253, 127
    %v265 = vpop.permute.xlu0 %264
    %v266 = vsel %vm230, %v259, %v261
    %v267 = vsel %vm230, %v263, %v265
    %v270 = vadd.f32 %v235, %v266
    %v271 = vadd.f32 %v236, %v267
    %273 = vset.pattern.permute.xlu0 0
    %274 = vperm.xlu0 %273, %v127
    %v275 = vpop.permute.xlu0 %274
    %v277 = vlaneseq
    %v278 = vshrl.u32 %v277, 7
    %v279 = vsub.s32 2, %v278
    %v280 = vrot.slane %v119, %v279
    %v281 = vlaneseq
    %v282 = vshrl.u32 %v281, 7
    %v283 = vsub.s32 2, %v282
    %v284 = vrot.slane %v120, %v283
    %v285 = vmul.f32 %v275, %v175
    %v286 = vmul.f32 %v275, %v280
    %v287 = vmul.f32 %v275, %v179
    %v288 = vmul.f32 %v275, %v284
    %293 = vrot.lane.b32.xlu0 %v285, 127
    %v294 = vpop.permute.xlu0 %293
    %295 = vrot.lane.b32.xlu0 %v286, 127
    %v296 = vpop.permute.xlu0 %295
    %297 = vrot.lane.b32.xlu0 %v287, 127
    %v298 = vpop.permute.xlu0 %297
    %299 = vrot.lane.b32.xlu0 %v288, 127
    %v300 = vpop.permute.xlu0 %299
    %v301 = vsel %vm230, %v294, %v296
    %v302 = vsel %vm230, %v298, %v300
    %v305 = vadd.f32 %v270, %v301
    %v306 = vadd.f32 %v271, %v302
    %308 = vset.pattern.permute.xlu0 0
    %309 = vperm.xlu0 %308, %v128
    %v310 = vpop.permute.xlu0 %309
    %v312 = vlaneseq
    %v313 = vshrl.u32 %v312, 7
    %v314 = vsub.s32 3, %v313
    %v315 = vrot.slane %v119, %v314
    %v316 = vlaneseq
    %v317 = vshrl.u32 %v316, 7
    %v318 = vsub.s32 3, %v317
    %v319 = vrot.slane %v120, %v318
    %v320 = vmul.f32 %v310, %v192
    %v321 = vmul.f32 %v310, %v315
    %v322 = vmul.f32 %v310, %v196
    %v323 = vmul.f32 %v310, %v319
    %328 = vrot.lane.b32.xlu0 %v320, 127
    %v329 = vpop.permute.xlu0 %328
    %330 = vrot.lane.b32.xlu0 %v321, 127
    %v331 = vpop.permute.xlu0 %330
    %332 = vrot.lane.b32.xlu0 %v322, 127
    %v333 = vpop.permute.xlu0 %332
    %334 = vrot.lane.b32.xlu0 %v323, 127
    %v335 = vpop.permute.xlu0 %334
    %v336 = vsel %vm230, %v329, %v331
    %v337 = vsel %vm230, %v333, %v335
    %v340 = vadd.f32 %v305, %v336
    %v341 = vadd.f32 %v306, %v337
    %343 = vset.pattern.permute.xlu0 0
    %344 = vperm.xlu0 %343, %v129
    %v345 = vpop.permute.xlu0 %344
    %v347 = vmul.f32 %v345, %v141
    %v348 = vmul.f32 %v345, %v209
    %v349 = vmul.f32 %v345, %v145
    %v350 = vmul.f32 %v345, %v213
    %355 = vrot.lane.b32.xlu0 %v347, 126
    %v356 = vpop.permute.xlu0 %355
    %357 = vrot.lane.b32.xlu0 %v348, 126
    %v358 = vpop.permute.xlu0 %357
    %359 = vrot.lane.b32.xlu0 %v349, 126
    %v360 = vpop.permute.xlu0 %359
    %361 = vrot.lane.b32.xlu0 %v350, 126
    %v362 = vpop.permute.xlu0 %361
    %vm363 = vcmask 1031168
    %v364 = vsel %vm363, %v356, %v358
    %v365 = vsel %vm363, %v360, %v362
    %v368 = vadd.f32 %v340, %v364
    %v369 = vadd.f32 %v341, %v365
    %371 = vset.pattern.permute.xlu0 0
    %372 = vperm.xlu0 %371, %v130
    %v373 = vpop.permute.xlu0 %372
    %v375 = vmul.f32 %v373, %v158
    %v376 = vmul.f32 %v373, %v245
    %v377 = vmul.f32 %v373, %v162
    %v378 = vmul.f32 %v373, %v249
    %383 = vrot.lane.b32.xlu0 %v375, 126
    %v384 = vpop.permute.xlu0 %383
    %385 = vrot.lane.b32.xlu0 %v376, 126
    %v386 = vpop.permute.xlu0 %385
    %387 = vrot.lane.b32.xlu0 %v377, 126
    %v388 = vpop.permute.xlu0 %387
    %389 = vrot.lane.b32.xlu0 %v378, 126
    %v390 = vpop.permute.xlu0 %389
    %v391 = vsel %vm363, %v384, %v386
    %v392 = vsel %vm363, %v388, %v390
    %v395 = vadd.f32 %v368, %v391
    %v396 = vadd.f32 %v369, %v392
    %398 = vset.pattern.permute.xlu0 0
    %399 = vperm.xlu0 %398, %v131
    %v400 = vpop.permute.xlu0 %399
    %v402 = vmul.f32 %v400, %v175
    %v403 = vmul.f32 %v400, %v280
    %v404 = vmul.f32 %v400, %v179
    %v405 = vmul.f32 %v400, %v284
    %410 = vrot.lane.b32.xlu0 %v402, 126
    %v411 = vpop.permute.xlu0 %410
    %412 = vrot.lane.b32.xlu0 %v403, 126
    %v413 = vpop.permute.xlu0 %412
    %414 = vrot.lane.b32.xlu0 %v404, 126
    %v415 = vpop.permute.xlu0 %414
    %416 = vrot.lane.b32.xlu0 %v405, 126
    %v417 = vpop.permute.xlu0 %416
    %v418 = vsel %vm363, %v411, %v413
    %v419 = vsel %vm363, %v415, %v417
    %v422 = vadd.f32 %v395, %v418
    %v423 = vadd.f32 %v396, %v419
    %425 = vset.pattern.permute.xlu0 0
    %426 = vperm.xlu0 %425, %v132
    %v427 = vpop.permute.xlu0 %426
    %v429 = vmul.f32 %v427, %v192
    %v430 = vmul.f32 %v427, %v315
    %v431 = vmul.f32 %v427, %v196
    %v432 = vmul.f32 %v427, %v319
    %437 = vrot.lane.b32.xlu0 %v429, 126
    %v438 = vpop.permute.xlu0 %437
    %439 = vrot.lane.b32.xlu0 %v430, 126
    %v440 = vpop.permute.xlu0 %439
    %441 = vrot.lane.b32.xlu0 %v431, 126
    %v442 = vpop.permute.xlu0 %441
    %443 = vrot.lane.b32.xlu0 %v432, 126
    %v444 = vpop.permute.xlu0 %443
    %v445 = vsel %vm363, %v438, %v440
    %v446 = vsel %vm363, %v442, %v444
    %v449 = vadd.f32 %v422, %v445
    %v450 = vadd.f32 %v423, %v446
    %v451 = vld [vmem:[%s3] sm:$0xf]
    %453 = vset.pattern.permute.xlu0 0
    %454 = vperm.xlu0 %453, %v451
    %v455 = vpop.permute.xlu0 %454
    %v457 = vadd.f32 %v449, %v455
    %v458 = vadd.f32 %v450, %v455
    %459 = vst [vmem:[%s4] sm:$0xf] %v457
    %460 = vst [vmem:[%s4 + $0x4] sm:$0xf] %v458
    %v461 = vlaneseq
    %v462 = vand.u32 %v461, 127
    %s463 = smul.u32 0, 128
    %v464 = vstv %s463
    %v465 = vadd.s32 %v464, %v462
    %vm466 = vcmp.lt.s32.totalorder %v465, 16
    %v467 = vsel %vm466, 1, 0
    %v468 = vcvt.s32.f32 %v467
    %v469 = vmul.f32 %v457, %v468
    %v470 = vmul.f32 %v458, %v468
    %vm471 = vcmask 1043456
    %v472 = vsel %vm471, %v469, 0.0
    %v473 = vsel %vm471, %v470, 0.0
    %v474 = vadd.f32 %v472, %v473
    %v475 = vsel %vm471, %v474, 0.0
    %476 = vadd.xlane.f32.xlu0 %v475
    %v477 = vpop.xlane.xlu0 %476
    %vm478 = vcmask 3072
    %479 = vst.msk [vmem:[%s5] sm:$0xf] %vm478, %v477
    %v480 = vmul.f32 %v469, %v469
    %v481 = vmul.f32 %v470, %v470
    %v482 = vsel %vm471, %v480, 0.0
    %v483 = vsel %vm471, %v481, 0.0
    %v484 = vadd.f32 %v482, %v483
    %v485 = vsel %vm471, %v484, 0.0
    %486 = vadd.xlane.f32.xlu0 %v485
    %v487 = vpop.xlane.xlu0 %486
    %vm488 = vcmask 11272
    %489 = vst.msk [vmem:[%s5] sm:$0xf] %vm488, %v487
    // Predicated region
    $region100: #{res_convblock.3} parent=1 // pred_check
      _
    $region101: #{res_convblock.3} parent=1 // pred_check_branch
      %491 = sbr.rel (0) target = $region103
    $region102: #{res_convblock.3} parent=1 // pred_region
      _
    $region103: #{res_convblock.3} parent=1 // pred_fallthru
      _
    // Predicated region
    $region104: #{res_convblock.3} parent=1 // pred_check
      _
    $region105: #{res_convblock.3} parent=1 // pred_check_branch
      %493 = sbr.rel (0) target = $region107
    $region106: #{res_convblock.3} parent=1 // pred_region
      _
    $region107: #{res_convblock.3} parent=1 // pred_fallthru
      _
    // Predicated region
    $region108: #{res_convblock.3} parent=1 // pred_check
      _
    $region109: #{res_convblock.3} parent=1 // pred_check_branch
      %495 = sbr.rel (0) target = $region111
    $region110: #{res_convblock.3} parent=1 // pred_region
      _
    $region111: #{res_convblock.3} parent=1 // pred_fallthru
      _
    // Predicated region
    $region112: #{res_convblock.3} parent=1 // pred_check
      _
    $region113: #{res_convblock.3} parent=1 // pred_check_branch
      %497 = sbr.rel (0) target = $region115
    $region114: #{res_convblock.3} parent=1 // pred_region
      _
    $region115: #{res_convblock.3} parent=1 // pred_fallthru
      _

// kernel: res_convblock.4
$region0: #{res_convblock.4}
  #allocation0 [shape = 'u32[]', space=smem, size = 0x4, offset = 0x4, fixed_abs, tag = 'smem constant byte address 0x4 - core index']
  #allocation1 [shape = 'u32[144,128]{1,0:T(1,128)}', space=vmem, size = 0x12000, scoped, tag = 'internal scratch']
  %s0 = inlined_call_operand.vmem [shape: f32[2,4,256], index: 0, kind: input, shape index: {}, may-alias: {0,1}]
  %s1 = inlined_call_operand.vmem [shape: f32[2,4,256], index: 1, kind: input, shape index: {}, may-alias: {0,1}]
  %s2 = inlined_call_operand.vmem [shape: f32[2,4,256], index: 2, kind: input, shape index: {}, may-alias: {2,3}]
  %s3 = inlined_call_operand.vmem [shape: f32[2,4,256], index: 3, kind: input, shape index: {}, may-alias: {2,3}]
  %s4 = inlined_call_operand.vmem [shape: f32[12,8,1], index: 4, kind: input, shape index: {}]
  %s5 = inlined_call_operand.vmem [shape: f32[1,8,1], index: 5, kind: input, shape index: {}]
  %s6 = inlined_call_operand.vmem [shape: f32[1,4,1], index: 6, kind: input, shape index: {}]
  %s7 = inlined_call_operand.vmem [shape: f32[1,4,1], index: 7, kind: input, shape index: {}]
  %s8 = inlined_call_operand.vmem [shape: f32[2,8,128], index: 8, kind: output, shape index: {0}]
  %s9 = inlined_call_operand.vmem [shape: f32[1,8,2], index: 9, kind: output, shape index: {1}]
  %10 = xla_tuple %s8, %s9
  %s11 = sld [smem:[#allocation0]]
  $region214: #{res_convblock.4} parent=0
    _
  %s13 = ssub.s32 1, %s11
  %s14 = scalar_select 0, %s13, %s11
  $region1: #{res_convblock.4} parent=0
    #allocation2 [shape = 'u8[4096]{0}', space=vmem, size = 0x1000, scoped, tag = 'input window, operand 0, single buffered']
    #allocation3 [shape = 'u8[4096]{0}', space=vmem, size = 0x1000, scoped, tag = 'input window, operand 1, single buffered']
    #allocation4 [shape = 'u8[4096]{0}', space=vmem, size = 0x1000, scoped, tag = 'input window, operand 2, single buffered']
    #allocation5 [shape = 'u8[4096]{0}', space=vmem, size = 0x1000, scoped, tag = 'input window, operand 3, single buffered']
    // Predicated region
    $region2: #{res_convblock.4} parent=1 // pred_check
      _
    $region3: #{res_convblock.4} parent=1 // pred_check_branch
      %16 = sbr.rel (0) target = $region5
    $region4: #{res_convblock.4} parent=1 // pred_region
      // Predicated region
      $region6: #{res_convblock.4} parent=4 // pred_check
        _
      $region7: #{res_convblock.4} parent=4 // pred_check_branch
        %18 = sbr.rel (0) target = $region9
      $region8: #{res_convblock.4} parent=4 // pred_region
        // Predicated region
        $region10: #{res_convblock.4} parent=8 // pred_check
          _
        $region11: #{res_convblock.4} parent=8 // pred_check_branch
          %20 = sbr.rel target = $region13
        $region12: #{res_convblock.4} parent=8 // pred_region
          // Predicated region
          $region25: #{res_convblock.4} parent=12 // pred_check
            _
          $region26: #{res_convblock.4} parent=12 // pred_check_branch
            %38 = sbr.rel (0) target = $region28
          $region27: #{res_convblock.4} parent=12 // pred_region
            loop: start=0, step=1, limit=1
            $region29: #{res_convblock.4} parent=27 // loop_pre_header
              _
            $region30: #{res_convblock.4} parent=27 // loop_header
              %s40 = sphi 0, %s44
              %p41 = scmp.ge.s32.totalorder %s40, 1
              %s45 = sphi %s0, %s0
              %s46 = sphi [#allocation2], [#allocation2]
            $region31: #{res_convblock.4} parent=27 // loop_header_branch
              %43 = sbr.rel (%p41) target = $region35
            $region32: #{res_convblock.4} parent=27 // loop_body
              _
            $region33: #{res_convblock.4} parent=27 // loop_footer
              %s44 = sadd.s32 1, %s40
            $region34: #{res_convblock.4} parent=27 // loop_footer_branch
              %39 = sbr.rel target = $region30
            $region35: #{res_convblock.4} parent=27 // loop_exit
              _
            %s48 = ssub.s32 16, 1
            loop: start=0, step=1, limit=1
            $region36: #{res_convblock.4} parent=27 // loop_pre_header
              _
            $region37: #{res_convblock.4} parent=27 // loop_header
              %s50 = sphi 0, %s54
              %p51 = scmp.ge.s32.totalorder %s50, 1
              %s55 = sphi %s0, %s0
              %s56 = sphi [#allocation2], [#allocation2]
            $region38: #{res_convblock.4} parent=27 // loop_header_branch
              %53 = sbr.rel (%p51) target = $region42
            $region39: #{res_convblock.4} parent=27 // loop_body
              %v57 = vld [vmem:[%s55] sm:%s48]
              %58 = vst [vmem:[%s56] sm:%s48] %v57
              %v59 = vld [vmem:[%s55 + $0x8] sm:%s48]
              %60 = vst [vmem:[%s56 + $0x4] sm:%s48] %v59
            $region40: #{res_convblock.4} parent=27 // loop_footer
              %s54 = sadd.s32 1, %s50
            $region41: #{res_convblock.4} parent=27 // loop_footer_branch
              %49 = sbr.rel target = $region37
            $region42: #{res_convblock.4} parent=27 // loop_exit
              _
          $region28: #{res_convblock.4} parent=12 // pred_fallthru
            _
        $region13: #{res_convblock.4} parent=8 // pred_fallthru
          _
        // Predicated region
        $region14: #{res_convblock.4} parent=8 // pred_check
          _
        $region15: #{res_convblock.4} parent=8 // pred_check_branch
          %22 = sbr.rel (0) target = $region17
        $region16: #{res_convblock.4} parent=8 // pred_region
          %s24 = ssub.s32 16, 1
          loop: start=0, step=1, limit=1
          $region18: #{res_convblock.4} parent=16 // loop_pre_header
            _
          $region19: #{res_convblock.4} parent=16 // loop_header
            %s26 = sphi 0, %s30
            %p27 = scmp.ge.s32.totalorder %s26, 1
            %s31 = sphi %s0, %s0
            %s32 = sphi [#allocation2], [#allocation2]
          $region20: #{res_convblock.4} parent=16 // loop_header_branch
            %29 = sbr.rel (%p27) target = $region24
          $region21: #{res_convblock.4} parent=16 // loop_body
            %v33 = vld [vmem:[%s31] sm:%s24]
            %34 = vst [vmem:[%s32] sm:%s24] %v33
            %v35 = vld [vmem:[%s31 + $0x8] sm:%s24]
            %36 = vst [vmem:[%s32 + $0x4] sm:%s24] %v35
          $region22: #{res_convblock.4} parent=16 // loop_footer
            %s30 = sadd.s32 1, %s26
          $region23: #{res_convblock.4} parent=16 // loop_footer_branch
            %25 = sbr.rel target = $region19
          $region24: #{res_convblock.4} parent=16 // loop_exit
            _
        $region17: #{res_convblock.4} parent=8 // pred_fallthru
          _
      $region9: #{res_convblock.4} parent=4 // pred_fallthru
        _
      %61 = vnop
    $region5: #{res_convblock.4} parent=1 // pred_fallthru
      _
    // Predicated region
    $region43: #{res_convblock.4} parent=1 // pred_check
      _
    $region44: #{res_convblock.4} parent=1 // pred_check_branch
      %63 = sbr.rel (0) target = $region46
    $region45: #{res_convblock.4} parent=1 // pred_region
      %s64 = sadd.s32 0, 1
      %s65 = smul.addr %s64, 4
      %s66 = scalar_lea.vmem %s1, %s65
      // Predicated region
      $region47: #{res_convblock.4} parent=45 // pred_check
        _
      $region48: #{res_convblock.4} parent=45 // pred_check_branch
        %68 = sbr.rel (0) target = $region50
      $region49: #{res_convblock.4} parent=45 // pred_region
        // Predicated region
        $region51: #{res_convblock.4} parent=49 // pred_check
          _
        $region52: #{res_convblock.4} parent=49 // pred_check_branch
          %70 = sbr.rel target = $region54
        $region53: #{res_convblock.4} parent=49 // pred_region
          // Predicated region
          $region66: #{res_convblock.4} parent=53 // pred_check
            _
          $region67: #{res_convblock.4} parent=53 // pred_check_branch
            %88 = sbr.rel (0) target = $region69
          $region68: #{res_convblock.4} parent=53 // pred_region
            loop: start=0, step=1, limit=1
            $region70: #{res_convblock.4} parent=68 // loop_pre_header
              _
            $region71: #{res_convblock.4} parent=68 // loop_header
              %s90 = sphi 0, %s94
              %p91 = scmp.ge.s32.totalorder %s90, 1
              %s95 = sphi %s66, %s66
              %s96 = sphi [#allocation3], [#allocation3]
            $region72: #{res_convblock.4} parent=68 // loop_header_branch
              %93 = sbr.rel (%p91) target = $region76
            $region73: #{res_convblock.4} parent=68 // loop_body
              _
            $region74: #{res_convblock.4} parent=68 // loop_footer
              %s94 = sadd.s32 1, %s90
            $region75: #{res_convblock.4} parent=68 // loop_footer_branch
              %89 = sbr.rel target = $region71
            $region76: #{res_convblock.4} parent=68 // loop_exit
              _
            %s98 = ssub.s32 16, 1
            loop: start=0, step=1, limit=1
            $region77: #{res_convblock.4} parent=68 // loop_pre_header
              _
            $region78: #{res_convblock.4} parent=68 // loop_header
              %s100 = sphi 0, %s104
              %p101 = scmp.ge.s32.totalorder %s100, 1
              %s105 = sphi %s66, %s66
              %s106 = sphi [#allocation3], [#allocation3]
            $region79: #{res_convblock.4} parent=68 // loop_header_branch
              %103 = sbr.rel (%p101) target = $region83
            $region80: #{res_convblock.4} parent=68 // loop_body
              %v107 = vld [vmem:[%s105] sm:%s98]
              %108 = vst [vmem:[%s106] sm:%s98] %v107
              %v109 = vld [vmem:[%s105 + $0x8] sm:%s98]
              %110 = vst [vmem:[%s106 + $0x4] sm:%s98] %v109
            $region81: #{res_convblock.4} parent=68 // loop_footer
              %s104 = sadd.s32 1, %s100
            $region82: #{res_convblock.4} parent=68 // loop_footer_branch
              %99 = sbr.rel target = $region78
            $region83: #{res_convblock.4} parent=68 // loop_exit
              _
          $region69: #{res_convblock.4} parent=53 // pred_fallthru
            _
        $region54: #{res_convblock.4} parent=49 // pred_fallthru
          _
        // Predicated region
        $region55: #{res_convblock.4} parent=49 // pred_check
          _
        $region56: #{res_convblock.4} parent=49 // pred_check_branch
          %72 = sbr.rel (0) target = $region58
        $region57: #{res_convblock.4} parent=49 // pred_region
          %s74 = ssub.s32 16, 1
          loop: start=0, step=1, limit=1
          $region59: #{res_convblock.4} parent=57 // loop_pre_header
            _
          $region60: #{res_convblock.4} parent=57 // loop_header
            %s76 = sphi 0, %s80
            %p77 = scmp.ge.s32.totalorder %s76, 1
            %s81 = sphi %s66, %s66
            %s82 = sphi [#allocation3], [#allocation3]
          $region61: #{res_convblock.4} parent=57 // loop_header_branch
            %79 = sbr.rel (%p77) target = $region65
          $region62: #{res_convblock.4} parent=57 // loop_body
            %v83 = vld [vmem:[%s81] sm:%s74]
            %84 = vst [vmem:[%s82] sm:%s74] %v83
            %v85 = vld [vmem:[%s81 + $0x8] sm:%s74]
            %86 = vst [vmem:[%s82 + $0x4] sm:%s74] %v85
          $region63: #{res_convblock.4} parent=57 // loop_footer
            %s80 = sadd.s32 1, %s76
          $region64: #{res_convblock.4} parent=57 // loop_footer_branch
            %75 = sbr.rel target = $region60
          $region65: #{res_convblock.4} parent=57 // loop_exit
            _
        $region58: #{res_convblock.4} parent=49 // pred_fallthru
          _
      $region50: #{res_convblock.4} parent=45 // pred_fallthru
        _
      %111 = vnop
    $region46: #{res_convblock.4} parent=1 // pred_fallthru
      _
    // Predicated region
    $region84: #{res_convblock.4} parent=1 // pred_check
      _
    $region85: #{res_convblock.4} parent=1 // pred_check_branch
      %113 = sbr.rel (0) target = $region87
    $region86: #{res_convblock.4} parent=1 // pred_region
      // Predicated region
      $region88: #{res_convblock.4} parent=86 // pred_check
        _
      $region89: #{res_convblock.4} parent=86 // pred_check_branch
        %115 = sbr.rel (0) target = $region91
      $region90: #{res_convblock.4} parent=86 // pred_region
        // Predicated region
        $region92: #{res_convblock.4} parent=90 // pred_check
          _
        $region93: #{res_convblock.4} parent=90 // pred_check_branch
          %117 = sbr.rel target = $region95
        $region94: #{res_convblock.4} parent=90 // pred_region
          // Predicated region
          $region107: #{res_convblock.4} parent=94 // pred_check
            _
          $region108: #{res_convblock.4} parent=94 // pred_check_branch
            %135 = sbr.rel (0) target = $region110
          $region109: #{res_convblock.4} parent=94 // pred_region
            loop: start=0, step=1, limit=1
            $region111: #{res_convblock.4} parent=109 // loop_pre_header
              _
            $region112: #{res_convblock.4} parent=109 // loop_header
              %s137 = sphi 0, %s141
              %p138 = scmp.ge.s32.totalorder %s137, 1
              %s142 = sphi %s2, %s2
              %s143 = sphi [#allocation4], [#allocation4]
            $region113: #{res_convblock.4} parent=109 // loop_header_branch
              %140 = sbr.rel (%p138) target = $region117
            $region114: #{res_convblock.4} parent=109 // loop_body
              _
            $region115: #{res_convblock.4} parent=109 // loop_footer
              %s141 = sadd.s32 1, %s137
            $region116: #{res_convblock.4} parent=109 // loop_footer_branch
              %136 = sbr.rel target = $region112
            $region117: #{res_convblock.4} parent=109 // loop_exit
              _
            %s145 = ssub.s32 16, 1
            loop: start=0, step=1, limit=1
            $region118: #{res_convblock.4} parent=109 // loop_pre_header
              _
            $region119: #{res_convblock.4} parent=109 // loop_header
              %s147 = sphi 0, %s151
              %p148 = scmp.ge.s32.totalorder %s147, 1
              %s152 = sphi %s2, %s2
              %s153 = sphi [#allocation4], [#allocation4]
            $region120: #{res_convblock.4} parent=109 // loop_header_branch
              %150 = sbr.rel (%p148) target = $region124
            $region121: #{res_convblock.4} parent=109 // loop_body
              %v154 = vld [vmem:[%s152] sm:%s145]
              %155 = vst [vmem:[%s153] sm:%s145] %v154
              %v156 = vld [vmem:[%s152 + $0x8] sm:%s145]
              %157 = vst [vmem:[%s153 + $0x4] sm:%s145] %v156
            $region122: #{res_convblock.4} parent=109 // loop_footer
              %s151 = sadd.s32 1, %s147
            $region123: #{res_convblock.4} parent=109 // loop_footer_branch
              %146 = sbr.rel target = $region119
            $region124: #{res_convblock.4} parent=109 // loop_exit
              _
          $region110: #{res_convblock.4} parent=94 // pred_fallthru
            _
        $region95: #{res_convblock.4} parent=90 // pred_fallthru
          _
        // Predicated region
        $region96: #{res_convblock.4} parent=90 // pred_check
          _
        $region97: #{res_convblock.4} parent=90 // pred_check_branch
          %119 = sbr.rel (0) target = $region99
        $region98: #{res_convblock.4} parent=90 // pred_region
          %s121 = ssub.s32 16, 1
          loop: start=0, step=1, limit=1
          $region100: #{res_convblock.4} parent=98 // loop_pre_header
            _
          $region101: #{res_convblock.4} parent=98 // loop_header
            %s123 = sphi 0, %s127
            %p124 = scmp.ge.s32.totalorder %s123, 1
            %s128 = sphi %s2, %s2
            %s129 = sphi [#allocation4], [#allocation4]
          $region102: #{res_convblock.4} parent=98 // loop_header_branch
            %126 = sbr.rel (%p124) target = $region106
          $region103: #{res_convblock.4} parent=98 // loop_body
            %v130 = vld [vmem:[%s128] sm:%s121]
            %131 = vst [vmem:[%s129] sm:%s121] %v130
            %v132 = vld [vmem:[%s128 + $0x8] sm:%s121]
            %133 = vst [vmem:[%s129 + $0x4] sm:%s121] %v132
          $region104: #{res_convblock.4} parent=98 // loop_footer
            %s127 = sadd.s32 1, %s123
          $region105: #{res_convblock.4} parent=98 // loop_footer_branch
            %122 = sbr.rel target = $region101
          $region106: #{res_convblock.4} parent=98 // loop_exit
            _
        $region99: #{res_convblock.4} parent=90 // pred_fallthru
          _
      $region91: #{res_convblock.4} parent=86 // pred_fallthru
        _
      %158 = vnop
    $region87: #{res_convblock.4} parent=1 // pred_fallthru
      _
    // Predicated region
    $region125: #{res_convblock.4} parent=1 // pred_check
      _
    $region126: #{res_convblock.4} parent=1 // pred_check_branch
      %160 = sbr.rel (0) target = $region128
    $region127: #{res_convblock.4} parent=1 // pred_region
      %s161 = sadd.s32 0, 1
      %s162 = smul.addr %s161, 4
      %s163 = scalar_lea.vmem %s3, %s162
      // Predicated region
      $region129: #{res_convblock.4} parent=127 // pred_check
        _
      $region130: #{res_convblock.4} parent=127 // pred_check_branch
        %165 = sbr.rel (0) target = $region132
      $region131: #{res_convblock.4} parent=127 // pred_region
        // Predicated region
        $region133: #{res_convblock.4} parent=131 // pred_check
          _
        $region134: #{res_convblock.4} parent=131 // pred_check_branch
          %167 = sbr.rel target = $region136
        $region135: #{res_convblock.4} parent=131 // pred_region
          // Predicated region
          $region148: #{res_convblock.4} parent=135 // pred_check
            _
          $region149: #{res_convblock.4} parent=135 // pred_check_branch
            %185 = sbr.rel (0) target = $region151
          $region150: #{res_convblock.4} parent=135 // pred_region
            loop: start=0, step=1, limit=1
            $region152: #{res_convblock.4} parent=150 // loop_pre_header
              _
            $region153: #{res_convblock.4} parent=150 // loop_header
              %s187 = sphi 0, %s191
              %p188 = scmp.ge.s32.totalorder %s187, 1
              %s192 = sphi %s163, %s163
              %s193 = sphi [#allocation5], [#allocation5]
            $region154: #{res_convblock.4} parent=150 // loop_header_branch
              %190 = sbr.rel (%p188) target = $region158
            $region155: #{res_convblock.4} parent=150 // loop_body
              _
            $region156: #{res_convblock.4} parent=150 // loop_footer
              %s191 = sadd.s32 1, %s187
            $region157: #{res_convblock.4} parent=150 // loop_footer_branch
              %186 = sbr.rel target = $region153
            $region158: #{res_convblock.4} parent=150 // loop_exit
              _
            %s195 = ssub.s32 16, 1
            loop: start=0, step=1, limit=1
            $region159: #{res_convblock.4} parent=150 // loop_pre_header
              _
            $region160: #{res_convblock.4} parent=150 // loop_header
              %s197 = sphi 0, %s201
              %p198 = scmp.ge.s32.totalorder %s197, 1
              %s202 = sphi %s163, %s163
              %s203 = sphi [#allocation5], [#allocation5]
            $region161: #{res_convblock.4} parent=150 // loop_header_branch
              %200 = sbr.rel (%p198) target = $region165
            $region162: #{res_convblock.4} parent=150 // loop_body
              %v204 = vld [vmem:[%s202] sm:%s195]
              %205 = vst [vmem:[%s203] sm:%s195] %v204
              %v206 = vld [vmem:[%s202 + $0x8] sm:%s195]
              %207 = vst [vmem:[%s203 + $0x4] sm:%s195] %v206
            $region163: #{res_convblock.4} parent=150 // loop_footer
              %s201 = sadd.s32 1, %s197
            $region164: #{res_convblock.4} parent=150 // loop_footer_branch
              %196 = sbr.rel target = $region160
            $region165: #{res_convblock.4} parent=150 // loop_exit
              _
          $region151: #{res_convblock.4} parent=135 // pred_fallthru
            _
        $region136: #{res_convblock.4} parent=131 // pred_fallthru
          _
        // Predicated region
        $region137: #{res_convblock.4} parent=131 // pred_check
          _
        $region138: #{res_convblock.4} parent=131 // pred_check_branch
          %169 = sbr.rel (0) target = $region140
        $region139: #{res_convblock.4} parent=131 // pred_region
          %s171 = ssub.s32 16, 1
          loop: start=0, step=1, limit=1
          $region141: #{res_convblock.4} parent=139 // loop_pre_header
            _
          $region142: #{res_convblock.4} parent=139 // loop_header
            %s173 = sphi 0, %s177
            %p174 = scmp.ge.s32.totalorder %s173, 1
            %s178 = sphi %s163, %s163
            %s179 = sphi [#allocation5], [#allocation5]
          $region143: #{res_convblock.4} parent=139 // loop_header_branch
            %176 = sbr.rel (%p174) target = $region147
          $region144: #{res_convblock.4} parent=139 // loop_body
            %v180 = vld [vmem:[%s178] sm:%s171]
            %181 = vst [vmem:[%s179] sm:%s171] %v180
            %v182 = vld [vmem:[%s178 + $0x8] sm:%s171]
            %183 = vst [vmem:[%s179 + $0x4] sm:%s171] %v182
          $region145: #{res_convblock.4} parent=139 // loop_footer
            %s177 = sadd.s32 1, %s173
          $region146: #{res_convblock.4} parent=139 // loop_footer_branch
            %172 = sbr.rel target = $region142
          $region147: #{res_convblock.4} parent=139 // loop_exit
            _
        $region140: #{res_convblock.4} parent=131 // pred_fallthru
          _
      $region132: #{res_convblock.4} parent=127 // pred_fallthru
        _
      %208 = vnop
    $region128: #{res_convblock.4} parent=1 // pred_fallthru
      _
    // Predicated region
    $region166: #{res_convblock.4} parent=1 // pred_check
      _
    $region167: #{res_convblock.4} parent=1 // pred_check_branch
      %210 = sbr.rel (0) target = $region169
    $region168: #{res_convblock.4} parent=1 // pred_region
      _
    $region169: #{res_convblock.4} parent=1 // pred_fallthru
      _
    // Predicated region
    $region170: #{res_convblock.4} parent=1 // pred_check
      _
    $region171: #{res_convblock.4} parent=1 // pred_check_branch
      %212 = sbr.rel (0) target = $region173
    $region172: #{res_convblock.4} parent=1 // pred_region
      _
    $region173: #{res_convblock.4} parent=1 // pred_fallthru
      _
    // Predicated region
    $region174: #{res_convblock.4} parent=1 // pred_check
      _
    $region175: #{res_convblock.4} parent=1 // pred_check_branch
      %214 = sbr.rel (0) target = $region177
    $region176: #{res_convblock.4} parent=1 // pred_region
      _
    $region177: #{res_convblock.4} parent=1 // pred_fallthru
      _
    // Predicated region
    $region178: #{res_convblock.4} parent=1 // pred_check
      _
    $region179: #{res_convblock.4} parent=1 // pred_check_branch
      %216 = sbr.rel (0) target = $region181
    $region180: #{res_convblock.4} parent=1 // pred_region
      _
    $region181: #{res_convblock.4} parent=1 // pred_fallthru
      _
    // Predicated region
    $region182: #{res_convblock.4} parent=1 // pred_check
      _
    $region183: #{res_convblock.4} parent=1 // pred_check_branch
      %218 = sbr.rel (0) target = $region185
    $region184: #{res_convblock.4} parent=1 // pred_region
      _
    $region185: #{res_convblock.4} parent=1 // pred_fallthru
      _
    // Predicated region
    $region186: #{res_convblock.4} parent=1 // pred_check
      _
    $region187: #{res_convblock.4} parent=1 // pred_check_branch
      %220 = sbr.rel (0) target = $region189
    $region188: #{res_convblock.4} parent=1 // pred_region
      _
    $region189: #{res_convblock.4} parent=1 // pred_fallthru
      _
    // Predicated region
    $region190: #{res_convblock.4} parent=1 // pred_check
      _
    $region191: #{res_convblock.4} parent=1 // pred_check_branch
      %222 = sbr.rel (0) target = $region193
    $region192: #{res_convblock.4} parent=1 // pred_region
      _
    $region193: #{res_convblock.4} parent=1 // pred_fallthru
      _
    // Predicated region
    $region194: #{res_convblock.4} parent=1 // pred_check
      _
    $region195: #{res_convblock.4} parent=1 // pred_check_branch
      %224 = sbr.rel (0) target = $region197
    $region196: #{res_convblock.4} parent=1 // pred_region
      _
    $region197: #{res_convblock.4} parent=1 // pred_fallthru
      _
    %s225 = sadd.s32 0, 1
    %s226 = sadd.s32 0, 1
    %v227 = vld [vmem:[#allocation2] sm:$0xf]
    %v228 = vld [vmem:[#allocation2 + $0x4] sm:$0xf]
    %v229 = vld [vmem:[#allocation3] sm:$0xf]
    %v230 = vld [vmem:[#allocation3 + $0x4] sm:$0xf]
    %v231 = vld [vmem:[#allocation4] sm:$0xf]
    %v232 = vld [vmem:[#allocation4 + $0x4] sm:$0xf]
    %v233 = vld [vmem:[#allocation5] sm:$0xf]
    %v234 = vld [vmem:[#allocation5 + $0x4] sm:$0xf]
    %v235 = vld [vmem:[%s6] sm:$0xf]
    %237 = vset.pattern.permute.xlu0 0
    %238 = vperm.xlu0 %237, %v235
    %v239 = vpop.permute.xlu0 %238
    %v241 = vmul.f32 %v227, %v239
    %v242 = vmul.f32 %v229, %v239
    %v243 = vmul.f32 %v228, %v239
    %v244 = vmul.f32 %v230, %v239
    %v245 = vld [vmem:[%s7] sm:$0xf]
    %247 = vset.pattern.permute.xlu0 0
    %248 = vperm.xlu0 %247, %v245
    %v249 = vpop.permute.xlu0 %248
    %v251 = vadd.f32 %v241, %v249
    %v252 = vadd.f32 %v242, %v249
    %v253 = vadd.f32 %v243, %v249
    %v254 = vadd.f32 %v244, %v249
    %v255 = vmax.f32 %v251, 0.0
    %v256 = vmax.f32 %v252, 0.0
    %v257 = vmax.f32 %v253, 0.0
    %v258 = vmax.f32 %v254, 0.0
    %v259 = vadd.f32 %v255, %v231
    %v260 = vadd.f32 %v256, %v233
    %v261 = vadd.f32 %v257, %v232
    %v262 = vadd.f32 %v258, %v234
    %v263 = vld [vmem:[%s4] sm:$0xff]
    %v264 = vld [vmem:[%s4 + $0x8] sm:$0xff]
    %v265 = vld [vmem:[%s4 + $0x10] sm:$0xff]
    %v266 = vld [vmem:[%s4 + $0x18] sm:$0xff]
    %v267 = vld [vmem:[%s4 + $0x20] sm:$0xff]
    %v268 = vld [vmem:[%s4 + $0x28] sm:$0xff]
    %v269 = vld [vmem:[%s4 + $0x30] sm:$0xff]
    %v270 = vld [vmem:[%s4 + $0x38] sm:$0xff]
    %v271 = vld [vmem:[%s4 + $0x40] sm:$0xff]
    %v272 = vld [vmem:[%s4 + $0x48] sm:$0xff]
    %v273 = vld [vmem:[%s4 + $0x50] sm:$0xff]
    %v274 = vld [vmem:[%s4 + $0x58] sm:$0xff]
    %276 = vset.pattern.permute.xlu0 0
    %277 = vperm.xlu0 %276, %v263
    %v278 = vpop.permute.xlu0 %277
    %v280 = vlaneseq
    %v281 = vshrl.u32 %v280, 7
    %v282 = vsub.s32 0, %v281
    %v283 = vrot.slane %v259, %v282
    %v284 = vlaneseq
    %v285 = vshrl.u32 %v284, 7
    %v286 = vsub.s32 0, %v285
    %v287 = vrot.slane %v261, %v286
    %v288 = vmul.f32 %v278, %v283
    %v289 = vmul.f32 %v278, %v287
    %v290 = vadd.f32 %v288, 0.0
    %v291 = vadd.f32 %v289, 0.0
    %293 = vset.pattern.permute.xlu0 0
    %294 = vperm.xlu0 %293, %v264
    %v295 = vpop.permute.xlu0 %294
    %v297 = vlaneseq
    %v298 = vshrl.u32 %v297, 7
    %v299 = vsub.s32 1, %v298
    %v300 = vrot.slane %v259, %v299
    %v301 = vlaneseq
    %v302 = vshrl.u32 %v301, 7
    %v303 = vsub.s32 1, %v302
    %v304 = vrot.slane %v261, %v303
    %v305 = vmul.f32 %v295, %v300
    %v306 = vmul.f32 %v295, %v304
    %v307 = vadd.f32 %v290, %v305
    %v308 = vadd.f32 %v291, %v306
    %310 = vset.pattern.permute.xlu0 0
    %311 = vperm.xlu0 %310, %v265
    %v312 = vpop.permute.xlu0 %311
    %v314 = vlaneseq
    %v315 = vshrl.u32 %v314, 7
    %v316 = vsub.s32 2, %v315
    %v317 = vrot.slane %v259, %v316
    %v318 = vlaneseq
    %v319 = vshrl.u32 %v318, 7
    %v320 = vsub.s32 2, %v319
    %v321 = vrot.slane %v261, %v320
    %v322 = vmul.f32 %v312, %v317
    %v323 = vmul.f32 %v312, %v321
    %v324 = vadd.f32 %v307, %v322
    %v325 = vadd.f32 %v308, %v323
    %327 = vset.pattern.permute.xlu0 0
    %328 = vperm.xlu0 %327, %v266
    %v329 = vpop.permute.xlu0 %328
    %v331 = vlaneseq
    %v332 = vshrl.u32 %v331, 7
    %v333 = vsub.s32 3, %v332
    %v334 = vrot.slane %v259, %v333
    %v335 = vlaneseq
    %v336 = vshrl.u32 %v335, 7
    %v337 = vsub.s32 3, %v336
    %v338 = vrot.slane %v261, %v337
    %v339 = vmul.f32 %v329, %v334
    %v340 = vmul.f32 %v329, %v338
    %v341 = vadd.f32 %v324, %v339
    %v342 = vadd.f32 %v325, %v340
    %344 = vset.pattern.permute.xlu0 0
    %345 = vperm.xlu0 %344, %v267
    %v346 = vpop.permute.xlu0 %345
    %v348 = vlaneseq
    %v349 = vshrl.u32 %v348, 7
    %v350 = vsub.s32 0, %v349
    %v351 = vrot.slane %v260, %v350
    %v352 = vlaneseq
    %v353 = vshrl.u32 %v352, 7
    %v354 = vsub.s32 0, %v353
    %v355 = vrot.slane %v262, %v354
    %v356 = vmul.f32 %v346, %v283
    %v357 = vmul.f32 %v346, %v351
    %v358 = vmul.f32 %v346, %v287
    %v359 = vmul.f32 %v346, %v355
    %364 = vrot.lane.b32.xlu0 %v356, 127
    %v365 = vpop.permute.xlu0 %364
    %366 = vrot.lane.b32.xlu0 %v357, 127
    %v367 = vpop.permute.xlu0 %366
    %368 = vrot.lane.b32.xlu0 %v358, 127
    %v369 = vpop.permute.xlu0 %368
    %370 = vrot.lane.b32.xlu0 %v359, 127
    %v371 = vpop.permute.xlu0 %370
    %vm372 = vcmask 1039360
    %v373 = vsel %vm372, %v365, %v367
    %v374 = vsel %vm372, %v369, %v371
    %v377 = vadd.f32 %v341, %v373
    %v378 = vadd.f32 %v342, %v374
    %380 = vset.pattern.permute.xlu0 0
    %381 = vperm.xlu0 %380, %v268
    %v382 = vpop.permute.xlu0 %381
    %v384 = vlaneseq
    %v385 = vshrl.u32 %v384, 7
    %v386 = vsub.s32 1, %v385
    %v387 = vrot.slane %v260, %v386
    %v388 = vlaneseq
    %v389 = vshrl.u32 %v388, 7
    %v390 = vsub.s32 1, %v389
    %v391 = vrot.slane %v262, %v390
    %v392 = vmul.f32 %v382, %v300
    %v393 = vmul.f32 %v382, %v387
    %v394 = vmul.f32 %v382, %v304
    %v395 = vmul.f32 %v382, %v391
    %400 = vrot.lane.b32.xlu0 %v392, 127
    %v401 = vpop.permute.xlu0 %400
    %402 = vrot.lane.b32.xlu0 %v393, 127
    %v403 = vpop.permute.xlu0 %402
    %404 = vrot.lane.b32.xlu0 %v394, 127
    %v405 = vpop.permute.xlu0 %404
    %406 = vrot.lane.b32.xlu0 %v395, 127
    %v407 = vpop.permute.xlu0 %406
    %v408 = vsel %vm372, %v401, %v403
    %v409 = vsel %vm372, %v405, %v407
    %v412 = vadd.f32 %v377, %v408
    %v413 = vadd.f32 %v378, %v409
    %415 = vset.pattern.permute.xlu0 0
    %416 = vperm.xlu0 %415, %v269
    %v417 = vpop.permute.xlu0 %416
    %v419 = vlaneseq
    %v420 = vshrl.u32 %v419, 7
    %v421 = vsub.s32 2, %v420
    %v422 = vrot.slane %v260, %v421
    %v423 = vlaneseq
    %v424 = vshrl.u32 %v423, 7
    %v425 = vsub.s32 2, %v424
    %v426 = vrot.slane %v262, %v425
    %v427 = vmul.f32 %v417, %v317
    %v428 = vmul.f32 %v417, %v422
    %v429 = vmul.f32 %v417, %v321
    %v430 = vmul.f32 %v417, %v426
    %435 = vrot.lane.b32.xlu0 %v427, 127
    %v436 = vpop.permute.xlu0 %435
    %437 = vrot.lane.b32.xlu0 %v428, 127
    %v438 = vpop.permute.xlu0 %437
    %439 = vrot.lane.b32.xlu0 %v429, 127
    %v440 = vpop.permute.xlu0 %439
    %441 = vrot.lane.b32.xlu0 %v430, 127
    %v442 = vpop.permute.xlu0 %441
    %v443 = vsel %vm372, %v436, %v438
    %v444 = vsel %vm372, %v440, %v442
    %v447 = vadd.f32 %v412, %v443
    %v448 = vadd.f32 %v413, %v444
    %450 = vset.pattern.permute.xlu0 0
    %451 = vperm.xlu0 %450, %v270
    %v452 = vpop.permute.xlu0 %451
    %v454 = vlaneseq
    %v455 = vshrl.u32 %v454, 7
    %v456 = vsub.s32 3, %v455
    %v457 = vrot.slane %v260, %v456
    %v458 = vlaneseq
    %v459 = vshrl.u32 %v458, 7
    %v460 = vsub.s32 3, %v459
    %v461 = vrot.slane %v262, %v460
    %v462 = vmul.f32 %v452, %v334
    %v463 = vmul.f32 %v452, %v457
    %v464 = vmul.f32 %v452, %v338
    %v465 = vmul.f32 %v452, %v461
    %470 = vrot.lane.b32.xlu0 %v462, 127
    %v471 = vpop.permute.xlu0 %470
    %472 = vrot.lane.b32.xlu0 %v463, 127
    %v473 = vpop.permute.xlu0 %472
    %474 = vrot.lane.b32.xlu0 %v464, 127
    %v475 = vpop.permute.xlu0 %474
    %476 = vrot.lane.b32.xlu0 %v465, 127
    %v477 = vpop.permute.xlu0 %476
    %v478 = vsel %vm372, %v471, %v473
    %v479 = vsel %vm372, %v475, %v477
    %v482 = vadd.f32 %v447, %v478
    %v483 = vadd.f32 %v448, %v479
    %485 = vset.pattern.permute.xlu0 0
    %486 = vperm.xlu0 %485, %v271
    %v487 = vpop.permute.xlu0 %486
    %v489 = vmul.f32 %v487, %v283
    %v490 = vmul.f32 %v487, %v351
    %v491 = vmul.f32 %v487, %v287
    %v492 = vmul.f32 %v487, %v355
    %497 = vrot.lane.b32.xlu0 %v489, 126
    %v498 = vpop.permute.xlu0 %497
    %499 = vrot.lane.b32.xlu0 %v490, 126
    %v500 = vpop.permute.xlu0 %499
    %501 = vrot.lane.b32.xlu0 %v491, 126
    %v502 = vpop.permute.xlu0 %501
    %503 = vrot.lane.b32.xlu0 %v492, 126
    %v504 = vpop.permute.xlu0 %503
    %vm505 = vcmask 1031168
    %v506 = vsel %vm505, %v498, %v500
    %v507 = vsel %vm505, %v502, %v504
    %v510 = vadd.f32 %v482, %v506
    %v511 = vadd.f32 %v483, %v507
    %513 = vset.pattern.permute.xlu0 0
    %514 = vperm.xlu0 %513, %v272
    %v515 = vpop.permute.xlu0 %514
    %v517 = vmul.f32 %v515, %v300
    %v518 = vmul.f32 %v515, %v387
    %v519 = vmul.f32 %v515, %v304
    %v520 = vmul.f32 %v515, %v391
    %525 = vrot.lane.b32.xlu0 %v517, 126
    %v526 = vpop.permute.xlu0 %525
    %527 = vrot.lane.b32.xlu0 %v518, 126
    %v528 = vpop.permute.xlu0 %527
    %529 = vrot.lane.b32.xlu0 %v519, 126
    %v530 = vpop.permute.xlu0 %529
    %531 = vrot.lane.b32.xlu0 %v520, 126
    %v532 = vpop.permute.xlu0 %531
    %v533 = vsel %vm505, %v526, %v528
    %v534 = vsel %vm505, %v530, %v532
    %v537 = vadd.f32 %v510, %v533
    %v538 = vadd.f32 %v511, %v534
    %540 = vset.pattern.permute.xlu0 0
    %541 = vperm.xlu0 %540, %v273
    %v542 = vpop.permute.xlu0 %541
    %v544 = vmul.f32 %v542, %v317
    %v545 = vmul.f32 %v542, %v422
    %v546 = vmul.f32 %v542, %v321
    %v547 = vmul.f32 %v542, %v426
    %552 = vrot.lane.b32.xlu0 %v544, 126
    %v553 = vpop.permute.xlu0 %552
    %554 = vrot.lane.b32.xlu0 %v545, 126
    %v555 = vpop.permute.xlu0 %554
    %556 = vrot.lane.b32.xlu0 %v546, 126
    %v557 = vpop.permute.xlu0 %556
    %558 = vrot.lane.b32.xlu0 %v547, 126
    %v559 = vpop.permute.xlu0 %558
    %v560 = vsel %vm505, %v553, %v555
    %v561 = vsel %vm505, %v557, %v559
    %v564 = vadd.f32 %v537, %v560
    %v565 = vadd.f32 %v538, %v561
    %567 = vset.pattern.permute.xlu0 0
    %568 = vperm.xlu0 %567, %v274
    %v569 = vpop.permute.xlu0 %568
    %v571 = vmul.f32 %v569, %v334
    %v572 = vmul.f32 %v569, %v457
    %v573 = vmul.f32 %v569, %v338
    %v574 = vmul.f32 %v569, %v461
    %579 = vrot.lane.b32.xlu0 %v571, 126
    %v580 = vpop.permute.xlu0 %579
    %581 = vrot.lane.b32.xlu0 %v572, 126
    %v582 = vpop.permute.xlu0 %581
    %583 = vrot.lane.b32.xlu0 %v573, 126
    %v584 = vpop.permute.xlu0 %583
    %585 = vrot.lane.b32.xlu0 %v574, 126
    %v586 = vpop.permute.xlu0 %585
    %v587 = vsel %vm505, %v580, %v582
    %v588 = vsel %vm505, %v584, %v586
    %v591 = vadd.f32 %v564, %v587
    %v592 = vadd.f32 %v565, %v588
    %v593 = vld [vmem:[%s5] sm:$0xff]
    %595 = vset.pattern.permute.xlu0 0
    %596 = vperm.xlu0 %595, %v593
    %v597 = vpop.permute.xlu0 %596
    %v599 = vadd.f32 %v591, %v597
    %v600 = vadd.f32 %v592, %v597
    %601 = vst [vmem:[%s8] sm:$0xff] %v599
    %602 = vst [vmem:[%s8 + $0x8] sm:$0xff] %v600
    %v603 = vlaneseq
    %v604 = vand.u32 %v603, 127
    %s605 = smul.u32 0, 128
    %v606 = vstv %s605
    %v607 = vadd.s32 %v606, %v604
    %vm608 = vcmp.lt.s32.totalorder %v607, 16
    %v609 = vsel %vm608, 1, 0
    %v610 = vcvt.s32.f32 %v609
    %v611 = vmul.f32 %v599, %v610
    %v612 = vmul.f32 %v600, %v610
    %v613 = vadd.f32 %v611, %v612
    %614 = vadd.xlane.f32.xlu0 %v613
    %v615 = vpop.xlane.xlu0 %614
    %vm616 = vcmask 7168
    %617 = vst.msk [vmem:[%s9] sm:$0xff] %vm616, %v615
    %v618 = vmul.f32 %v611, %v611
    %v619 = vmul.f32 %v612, %v612
    %v620 = vadd.f32 %v618, %v619
    %621 = vadd.xlane.f32.xlu0 %v620
    %v622 = vpop.xlane.xlu0 %621
    %vm623 = vcmask 15368
    %624 = vst.msk [vmem:[%s9] sm:$0xff] %vm623, %v622
    // Predicated region
    $region198: #{res_convblock.4} parent=1 // pred_check
      _
    $region199: #{res_convblock.4} parent=1 // pred_check_branch
      %626 = sbr.rel (0) target = $region201
    $region200: #{res_convblock.4} parent=1 // pred_region
      _
    $region201: #{res_convblock.4} parent=1 // pred_fallthru
      _
    // Predicated region
    $region202: #{res_convblock.4} parent=1 // pred_check
      _
    $region203: #{res_convblock.4} parent=1 // pred_check_branch
      %628 = sbr.rel (0) target = $region205
    $region204: #{res_convblock.4} parent=1 // pred_region
      _
    $region205: #{res_convblock.4} parent=1 // pred_fallthru
      _
    // Predicated region
    $region206: #{res_convblock.4} parent=1 // pred_check
      _
    $region207: #{res_convblock.4} parent=1 // pred_check_branch
      %630 = sbr.rel (0) target = $region209
    $region208: #{res_convblock.4} parent=1 // pred_region
      _
    $region209: #{res_convblock.4} parent=1 // pred_fallthru
      _
    // Predicated region
    $region210: #{res_convblock.4} parent=1 // pred_check
      _
    $region211: #{res_convblock.4} parent=1 // pred_check_branch
      %632 = sbr.rel (0) target = $region213
    $region212: #{res_convblock.4} parent=1 // pred_region
      _
    $region213: #{res_convblock.4} parent=1 // pred_fallthru
      _

</llo_original>
